<compile_context>
chip_gen: v7x
topology: tpu7x:2x2x1
jax: 0.10.0
libtpu: 0.0.40
codegen_flags: <defaults>
</compile_context>

<pallas_src>
import functools

import jax
import jax.numpy as jnp
from jax import lax
from jax.experimental import pallas as pl
from jax.experimental.pallas import tpu as pltpu

_NEG_INF = -1e10


def _graph_conv_kernel(adj_ref, edges_ref, node_ref, wij_ref, we_ref,
                       out_ref, dist_ref, *, dilation):
    adj = adj_ref[0]          # (H, H)     float32
    edges = edges_ref[0]      # (E, H, H)  float32
    node = node_ref[0]        # (Cn, H)    float32
    wij = wij_ref[...]        # (2*nout, Cn)

    E = edges.shape[0]
    H = adj.shape[-1]
    nout = out_ref.shape[1]

    adj_d = (adj == dilation).astype(jnp.float32)                    # (H, H)

    # ---- EdgeConv 1x1 conv: dist[c] = sum_e we[c, e] * edges[e] ------------
    # we lives in SMEM; scalar * (H, H)-plane FMAs keep edges lane-dense and
    # avoid any (..., E) lane-sparse layout or HBM transpose of edges.
    for c in range(nout):
        acc = we_ref[c, 0] * edges[0]
        for e in range(1, E):
            acc = acc + we_ref[c, e] * edges[e]
        dist_ref[c] = acc
    dist = dist_ref[...]                                             # (nout,H,H)

    # ---- masked softmax over j, re-masked by adj_d (EdgeConv) --------------
    valid = adj_d[None, :, :] > 0.0                                  # (1, H, H)
    e_out = jnp.where(valid, dist, jnp.float32(_NEG_INF))
    m = jnp.max(e_out, axis=-1, keepdims=True)
    p = jnp.exp(e_out - m)
    denom = jnp.sum(p, axis=-1, keepdims=True)
    ew = p * pl.reciprocal(denom, approx=True) * adj_d[None, :, :]   # (nout,H,H)

    # ---- NodeConv, hoisted: xw = [Wi; Wj] @ node  (one fused MXU matmul) ---
    xw = jnp.dot(wij, node, preferred_element_type=jnp.float32)      # (2*nout,H)
    xwi = xw[:nout]                                                  # (nout, H)
    xwj = xw[nout:]                                                  # (nout, H)

    # diag(i==j) picks convi features, off-diagonal picks convj; the adjacency
    # mask is already folded into ew (adj_d is binary), so one select + one
    # j-reduction reproduces  sum_j (I*ci + (1-I)*cj) * edge_weights.
    row = lax.broadcasted_iota(jnp.int32, (H, H), 0)
    col = lax.broadcasted_iota(jnp.int32, (H, H), 1)
    eye = (row == col)[None, :, :]                                   # (1, H, H)
    sel = jnp.where(eye, xwi[:, None, :], xwj[:, None, :])           # (nout,H,H)

    out_ref[0] = jnp.sum(ew * sel, axis=-1).astype(out_ref.dtype)    # (nout, H)


def graph_conv(adj, edge, node, params, *, dilation=1):
    """Pallas GraphConv forward.

    adj: (B, H, H), edge: (B, E, H, H), node: (B, Cn, H) -> (B, nout, H),
    identical layouts / semantics to the PyTorch module (forward only).
    """
    adj = adj.astype(jnp.float32)
    edge = edge.astype(jnp.float32)
    node = node.astype(jnp.float32)

    B, H, _ = adj.shape
    E = edge.shape[1]
    Cn = node.shape[1]
    we = params['edge_conv_w'].astype(jnp.float32)   # (nout, E)
    wi = params['convi_w'].astype(jnp.float32)       # (nout, Cn)
    wj = params['convj_w'].astype(jnp.float32)       # (nout, Cn)
    nout = we.shape[0]
    wij = jnp.concatenate([wi, wj], axis=0)          # (2*nout, Cn) fused weight

    kernel = functools.partial(_graph_conv_kernel, dilation=float(dilation))

    return pl.pallas_call(
        kernel,
        out_shape=jax.ShapeDtypeStruct((B, nout, H), jnp.float32),
        grid=(B,),
        in_specs=[
            pl.BlockSpec((1, H, H), lambda b: (b, 0, 0)),            # adj
            pl.BlockSpec((1, E, H, H), lambda b: (b, 0, 0, 0)),      # edges (native NCHW)
            pl.BlockSpec((1, Cn, H), lambda b: (b, 0, 0)),           # node  (native NCW)
            pl.BlockSpec((2 * nout, Cn), lambda b: (0, 0)),          # fused Wi|Wj (VMEM)
            pl.BlockSpec(memory_space=pltpu.MemorySpace.SMEM),       # edge-conv weight (scalars)
        ],
        out_specs=pl.BlockSpec((1, nout, H), lambda b: (b, 0, 0)),
        scratch_shapes=[pltpu.VMEM((nout, H, H), jnp.float32)],
        compiler_params=pltpu.CompilerParams(
            dimension_semantics=("parallel",),
            vmem_limit_bytes=32 * 1024 * 1024,
        ),
    )(adj, edge, node, wij, we)


def graph_conv_reference(adj, edge, node, params, *, dilation=1):
    """Literal (unoptimized) JAX translation of the PyTorch module, for checking."""
    we = params['edge_conv_w']
    wi = params['convi_w']
    wj = params['convj_w']
    adj_d = (adj == dilation).astype(jnp.float32)[:, None]           # (B,1,H,H)
    dist = jnp.einsum('ce,behw->bchw', we, edge)
    out = dist * adj_d
    out = _NEG_INF * (adj_d == 0).astype(jnp.float32) + out
    ew = jax.nn.softmax(out, axis=-1) * adj_d
    node_b = node[:, :, None, :] * adj_d                             # (B,Cn,H,H)
    ci = jnp.einsum('ck,bkhw->bchw', wi, node_b)
    cj = jnp.einsum('ck,bkhw->bchw', wj, node_b)
    eye = jnp.eye(adj.shape[-1], dtype=jnp.float32)
    nf = eye * ci + (1.0 - eye) * cj
    return jnp.sum(nf * ew, axis=-1)


if __name__ == "__main__":
    B, E, Cn, H = 2, 4, 16, 16
    nout, dilation = 8, 1

    key = jax.random.PRNGKey(0)
    k_adj, k_edge, k_node, k_we, k_wi, k_wj = jax.random.split(key, 6)

    adj = jax.random.randint(k_adj, (B, H, H), 0, 3).astype(jnp.float32)
    edge = jax.random.normal(k_edge, (B, E, H, H), dtype=jnp.float32)
    node = jax.random.normal(k_node, (B, Cn, H), dtype=jnp.float32)
    params = {
        'edge_conv_w': 0.3 * jax.random.normal(k_we, (nout, E), dtype=jnp.float32),
        'convi_w': 0.3 * jax.random.normal(k_wi, (nout, Cn), dtype=jnp.float32),
        'convj_w': 0.3 * jax.random.normal(k_wj, (nout, Cn), dtype=jnp.float32),
    }

    fn = jax.jit(functools.partial(graph_conv, dilation=dilation))
    out = jax.block_until_ready(fn(adj, edge, node, params))

    assert out.shape == (B, nout, H)
    assert bool(jnp.all(jnp.isfinite(out)))

    ref = graph_conv_reference(adj, edge, node, params, dilation=dilation)
    max_err = float(jnp.max(jnp.abs(out - ref)))
    assert max_err < 3e-2, f"mismatch vs reference: max_err={max_err}"

    print("KERNEL_OK")
</pallas_src>

<mosaic_0001>
module attributes {stable_mosaic.version = 11 : i64} {
  func.func @_graph_conv_kernel(%arg0: i32, %arg1: memref<1x16x16xf32, #tpu.memory_space<vmem>>, %arg2: memref<1x4x16x16xf32, #tpu.memory_space<vmem>>, %arg3: memref<1x16x16xf32, #tpu.memory_space<vmem>>, %arg4: memref<16x16xf32, #tpu.memory_space<vmem>>, %arg5: memref<8x4xf32, #tpu.memory_space<smem>>, %arg6: memref<1x8x16xf32, #tpu.memory_space<vmem>>, %arg7: memref<8x16x16xf32, #tpu.memory_space<vmem>>) attributes {dimension_semantics = [#tpu.dimension_semantics<parallel>], iteration_bounds = array<i64: 2>, scalar_prefetch = 0 : i64, scratch_operands = 1 : i64, tpu.core_type = #tpu.core_type<tc>, window_params = [{transform_indices = @transform_0, window_bounds = array<i64: 1, 16, 16>}, {transform_indices = @transform_1, window_bounds = array<i64: 1, 4, 16, 16>}, {transform_indices = @transform_2, window_bounds = array<i64: 1, 16, 16>}, {pipeline_mode = #tpu.pipeline_mode<synchronous>, transform_indices = @transform_3, window_bounds = array<i64: 16, 16>}, {transform_indices = @transform_4, window_bounds = array<i64: 8, 4>}, {transform_indices = @transform_5, window_bounds = array<i64: 1, 8, 16>}]} {
    %c0 = arith.constant 0 : index
    %c0_0 = arith.constant 0 : index
    %c0_1 = arith.constant 0 : index
    %0 = vector.load %arg1[%c0, %c0_0, %c0_1] : memref<1x16x16xf32, #tpu.memory_space<vmem>>, vector<1x16x16xf32>
    %1 = vector.shape_cast %0 : vector<1x16x16xf32> to vector<16x16xf32>
    %c0_2 = arith.constant 0 : index
    %c0_3 = arith.constant 0 : index
    %c0_4 = arith.constant 0 : index
    %c0_5 = arith.constant 0 : index
    %2 = vector.load %arg2[%c0_2, %c0_3, %c0_4, %c0_5] : memref<1x4x16x16xf32, #tpu.memory_space<vmem>>, vector<1x4x16x16xf32>
    %3 = vector.shape_cast %2 : vector<1x4x16x16xf32> to vector<4x16x16xf32>
    %c0_6 = arith.constant 0 : index
    %c0_7 = arith.constant 0 : index
    %c0_8 = arith.constant 0 : index
    %4 = vector.load %arg3[%c0_6, %c0_7, %c0_8] : memref<1x16x16xf32, #tpu.memory_space<vmem>>, vector<1x16x16xf32>
    %5 = vector.shape_cast %4 : vector<1x16x16xf32> to vector<16x16xf32>
    %c0_9 = arith.constant 0 : index
    %c0_10 = arith.constant 0 : index
    %6 = vector.load %arg4[%c0_9, %c0_10] : memref<16x16xf32, #tpu.memory_space<vmem>>, vector<16x16xf32>
    %cst = arith.constant 1.000000e+00 : f32
    %7 = vector.broadcast %cst : f32 to vector<16x16xf32>
    %8 = arith.cmpf oeq, %1, %7 : vector<16x16xf32>
    %9 = arith.extui %8 : vector<16x16xi1> to vector<16x16xi32>
    %10 = arith.sitofp %9 : vector<16x16xi32> to vector<16x16xf32>
    %c0_11 = arith.constant 0 : index
    %c0_12 = arith.constant 0 : index
    %11 = memref.load %arg5[%c0_11, %c0_12] : memref<8x4xf32, #tpu.memory_space<smem>>
    %12 = vector.extract_strided_slice %3 {offsets = [0, 0, 0], sizes = [1, 16, 16], strides = [1, 1, 1]} : vector<4x16x16xf32> to vector<1x16x16xf32>
    %13 = vector.shape_cast %12 : vector<1x16x16xf32> to vector<16x16xf32>
    %14 = vector.broadcast %11 : f32 to vector<16x16xf32>
    %15 = arith.mulf %14, %13 : vector<16x16xf32>
    %c0_13 = arith.constant 0 : index
    %c1 = arith.constant 1 : index
    %16 = memref.load %arg5[%c0_13, %c1] : memref<8x4xf32, #tpu.memory_space<smem>>
    %17 = vector.extract_strided_slice %3 {offsets = [1, 0, 0], sizes = [1, 16, 16], strides = [1, 1, 1]} : vector<4x16x16xf32> to vector<1x16x16xf32>
    %18 = vector.shape_cast %17 : vector<1x16x16xf32> to vector<16x16xf32>
    %19 = vector.broadcast %16 : f32 to vector<16x16xf32>
    %20 = arith.mulf %19, %18 : vector<16x16xf32>
    %21 = arith.addf %15, %20 : vector<16x16xf32>
    %c0_14 = arith.constant 0 : index
    %c2 = arith.constant 2 : index
    %22 = memref.load %arg5[%c0_14, %c2] : memref<8x4xf32, #tpu.memory_space<smem>>
    %23 = vector.extract_strided_slice %3 {offsets = [2, 0, 0], sizes = [1, 16, 16], strides = [1, 1, 1]} : vector<4x16x16xf32> to vector<1x16x16xf32>
    %24 = vector.shape_cast %23 : vector<1x16x16xf32> to vector<16x16xf32>
    %25 = vector.broadcast %22 : f32 to vector<16x16xf32>
    %26 = arith.mulf %25, %24 : vector<16x16xf32>
    %27 = arith.addf %21, %26 : vector<16x16xf32>
    %c0_15 = arith.constant 0 : index
    %c3 = arith.constant 3 : index
    %28 = memref.load %arg5[%c0_15, %c3] : memref<8x4xf32, #tpu.memory_space<smem>>
    %29 = vector.extract_strided_slice %3 {offsets = [3, 0, 0], sizes = [1, 16, 16], strides = [1, 1, 1]} : vector<4x16x16xf32> to vector<1x16x16xf32>
    %30 = vector.shape_cast %29 : vector<1x16x16xf32> to vector<16x16xf32>
    %31 = vector.broadcast %28 : f32 to vector<16x16xf32>
    %32 = arith.mulf %31, %30 : vector<16x16xf32>
    %33 = arith.addf %27, %32 : vector<16x16xf32>
    %c0_16 = arith.constant 0 : index
    %c0_17 = arith.constant 0 : index
    %c0_18 = arith.constant 0 : index
    %34 = vector.load %arg7[%c0_16, %c0_17, %c0_18] : memref<8x16x16xf32, #tpu.memory_space<vmem>>, vector<1x16x16xf32>
    %35 = vector.shape_cast %34 : vector<1x16x16xf32> to vector<16x16xf32>
    %36 = vector.shape_cast %33 : vector<16x16xf32> to vector<1x16x16xf32>
    tpu.vector_store %arg7[%c0_16, %c0_17, %c0_18], %36 {strides = array<i32>} : memref<8x16x16xf32, #tpu.memory_space<vmem>>, vector<1x16x16xf32>,
    %c1_19 = arith.constant 1 : index
    %c0_20 = arith.constant 0 : index
    %37 = memref.load %arg5[%c1_19, %c0_20] : memref<8x4xf32, #tpu.memory_space<smem>>
    %38 = vector.extract_strided_slice %3 {offsets = [0, 0, 0], sizes = [1, 16, 16], strides = [1, 1, 1]} : vector<4x16x16xf32> to vector<1x16x16xf32>
    %39 = vector.shape_cast %38 : vector<1x16x16xf32> to vector<16x16xf32>
    %40 = vector.broadcast %37 : f32 to vector<16x16xf32>
    %41 = arith.mulf %40, %39 : vector<16x16xf32>
    %c1_21 = arith.constant 1 : index
    %c1_22 = arith.constant 1 : index
    %42 = memref.load %arg5[%c1_21, %c1_22] : memref<8x4xf32, #tpu.memory_space<smem>>
    %43 = vector.extract_strided_slice %3 {offsets = [1, 0, 0], sizes = [1, 16, 16], strides = [1, 1, 1]} : vector<4x16x16xf32> to vector<1x16x16xf32>
    %44 = vector.shape_cast %43 : vector<1x16x16xf32> to vector<16x16xf32>
    %45 = vector.broadcast %42 : f32 to vector<16x16xf32>
    %46 = arith.mulf %45, %44 : vector<16x16xf32>
    %47 = arith.addf %41, %46 : vector<16x16xf32>
    %c1_23 = arith.constant 1 : index
    %c2_24 = arith.constant 2 : index
    %48 = memref.load %arg5[%c1_23, %c2_24] : memref<8x4xf32, #tpu.memory_space<smem>>
    %49 = vector.extract_strided_slice %3 {offsets = [2, 0, 0], sizes = [1, 16, 16], strides = [1, 1, 1]} : vector<4x16x16xf32> to vector<1x16x16xf32>
    %50 = vector.shape_cast %49 : vector<1x16x16xf32> to vector<16x16xf32>
    %51 = vector.broadcast %48 : f32 to vector<16x16xf32>
    %52 = arith.mulf %51, %50 : vector<16x16xf32>
    %53 = arith.addf %47, %52 : vector<16x16xf32>
    %c1_25 = arith.constant 1 : index
    %c3_26 = arith.constant 3 : index
    %54 = memref.load %arg5[%c1_25, %c3_26] : memref<8x4xf32, #tpu.memory_space<smem>>
    %55 = vector.extract_strided_slice %3 {offsets = [3, 0, 0], sizes = [1, 16, 16], strides = [1, 1, 1]} : vector<4x16x16xf32> to vector<1x16x16xf32>
    %56 = vector.shape_cast %55 : vector<1x16x16xf32> to vector<16x16xf32>
    %57 = vector.broadcast %54 : f32 to vector<16x16xf32>
    %58 = arith.mulf %57, %56 : vector<16x16xf32>
    %59 = arith.addf %53, %58 : vector<16x16xf32>
    %c1_27 = arith.constant 1 : index
    %c0_28 = arith.constant 0 : index
    %c0_29 = arith.constant 0 : index
    %60 = vector.load %arg7[%c1_27, %c0_28, %c0_29] : memref<8x16x16xf32, #tpu.memory_space<vmem>>, vector<1x16x16xf32>
    %61 = vector.shape_cast %60 : vector<1x16x16xf32> to vector<16x16xf32>
    %62 = vector.shape_cast %59 : vector<16x16xf32> to vector<1x16x16xf32>
    tpu.vector_store %arg7[%c1_27, %c0_28, %c0_29], %62 {strides = array<i32>} : memref<8x16x16xf32, #tpu.memory_space<vmem>>, vector<1x16x16xf32>,
    %c2_30 = arith.constant 2 : index
    %c0_31 = arith.constant 0 : index
    %63 = memref.load %arg5[%c2_30, %c0_31] : memref<8x4xf32, #tpu.memory_space<smem>>
    %64 = vector.extract_strided_slice %3 {offsets = [0, 0, 0], sizes = [1, 16, 16], strides = [1, 1, 1]} : vector<4x16x16xf32> to vector<1x16x16xf32>
    %65 = vector.shape_cast %64 : vector<1x16x16xf32> to vector<16x16xf32>
    %66 = vector.broadcast %63 : f32 to vector<16x16xf32>
    %67 = arith.mulf %66, %65 : vector<16x16xf32>
    %c2_32 = arith.constant 2 : index
    %c1_33 = arith.constant 1 : index
    %68 = memref.load %arg5[%c2_32, %c1_33] : memref<8x4xf32, #tpu.memory_space<smem>>
    %69 = vector.extract_strided_slice %3 {offsets = [1, 0, 0], sizes = [1, 16, 16], strides = [1, 1, 1]} : vector<4x16x16xf32> to vector<1x16x16xf32>
    %70 = vector.shape_cast %69 : vector<1x16x16xf32> to vector<16x16xf32>
    %71 = vector.broadcast %68 : f32 to vector<16x16xf32>
    %72 = arith.mulf %71, %70 : vector<16x16xf32>
    %73 = arith.addf %67, %72 : vector<16x16xf32>
    %c2_34 = arith.constant 2 : index
    %c2_35 = arith.constant 2 : index
    %74 = memref.load %arg5[%c2_34, %c2_35] : memref<8x4xf32, #tpu.memory_space<smem>>
    %75 = vector.extract_strided_slice %3 {offsets = [2, 0, 0], sizes = [1, 16, 16], strides = [1, 1, 1]} : vector<4x16x16xf32> to vector<1x16x16xf32>
    %76 = vector.shape_cast %75 : vector<1x16x16xf32> to vector<16x16xf32>
    %77 = vector.broadcast %74 : f32 to vector<16x16xf32>
    %78 = arith.mulf %77, %76 : vector<16x16xf32>
    %79 = arith.addf %73, %78 : vector<16x16xf32>
    %c2_36 = arith.constant 2 : index
    %c3_37 = arith.constant 3 : index
    %80 = memref.load %arg5[%c2_36, %c3_37] : memref<8x4xf32, #tpu.memory_space<smem>>
    %81 = vector.extract_strided_slice %3 {offsets = [3, 0, 0], sizes = [1, 16, 16], strides = [1, 1, 1]} : vector<4x16x16xf32> to vector<1x16x16xf32>
    %82 = vector.shape_cast %81 : vector<1x16x16xf32> to vector<16x16xf32>
    %83 = vector.broadcast %80 : f32 to vector<16x16xf32>
    %84 = arith.mulf %83, %82 : vector<16x16xf32>
    %85 = arith.addf %79, %84 : vector<16x16xf32>
    %c2_38 = arith.constant 2 : index
    %c0_39 = arith.constant 0 : index
    %c0_40 = arith.constant 0 : index
    %86 = vector.load %arg7[%c2_38, %c0_39, %c0_40] : memref<8x16x16xf32, #tpu.memory_space<vmem>>, vector<1x16x16xf32>
    %87 = vector.shape_cast %86 : vector<1x16x16xf32> to vector<16x16xf32>
    %88 = vector.shape_cast %85 : vector<16x16xf32> to vector<1x16x16xf32>
    tpu.vector_store %arg7[%c2_38, %c0_39, %c0_40], %88 {strides = array<i32>} : memref<8x16x16xf32, #tpu.memory_space<vmem>>, vector<1x16x16xf32>,
    %c3_41 = arith.constant 3 : index
    %c0_42 = arith.constant 0 : index
    %89 = memref.load %arg5[%c3_41, %c0_42] : memref<8x4xf32, #tpu.memory_space<smem>>
    %90 = vector.extract_strided_slice %3 {offsets = [0, 0, 0], sizes = [1, 16, 16], strides = [1, 1, 1]} : vector<4x16x16xf32> to vector<1x16x16xf32>
    %91 = vector.shape_cast %90 : vector<1x16x16xf32> to vector<16x16xf32>
    %92 = vector.broadcast %89 : f32 to vector<16x16xf32>
    %93 = arith.mulf %92, %91 : vector<16x16xf32>
    %c3_43 = arith.constant 3 : index
    %c1_44 = arith.constant 1 : index
    %94 = memref.load %arg5[%c3_43, %c1_44] : memref<8x4xf32, #tpu.memory_space<smem>>
    %95 = vector.extract_strided_slice %3 {offsets = [1, 0, 0], sizes = [1, 16, 16], strides = [1, 1, 1]} : vector<4x16x16xf32> to vector<1x16x16xf32>
    %96 = vector.shape_cast %95 : vector<1x16x16xf32> to vector<16x16xf32>
    %97 = vector.broadcast %94 : f32 to vector<16x16xf32>
    %98 = arith.mulf %97, %96 : vector<16x16xf32>
    %99 = arith.addf %93, %98 : vector<16x16xf32>
    %c3_45 = arith.constant 3 : index
    %c2_46 = arith.constant 2 : index
    %100 = memref.load %arg5[%c3_45, %c2_46] : memref<8x4xf32, #tpu.memory_space<smem>>
    %101 = vector.extract_strided_slice %3 {offsets = [2, 0, 0], sizes = [1, 16, 16], strides = [1, 1, 1]} : vector<4x16x16xf32> to vector<1x16x16xf32>
    %102 = vector.shape_cast %101 : vector<1x16x16xf32> to vector<16x16xf32>
    %103 = vector.broadcast %100 : f32 to vector<16x16xf32>
    %104 = arith.mulf %103, %102 : vector<16x16xf32>
    %105 = arith.addf %99, %104 : vector<16x16xf32>
    %c3_47 = arith.constant 3 : index
    %c3_48 = arith.constant 3 : index
    %106 = memref.load %arg5[%c3_47, %c3_48] : memref<8x4xf32, #tpu.memory_space<smem>>
    %107 = vector.extract_strided_slice %3 {offsets = [3, 0, 0], sizes = [1, 16, 16], strides = [1, 1, 1]} : vector<4x16x16xf32> to vector<1x16x16xf32>
    %108 = vector.shape_cast %107 : vector<1x16x16xf32> to vector<16x16xf32>
    %109 = vector.broadcast %106 : f32 to vector<16x16xf32>
    %110 = arith.mulf %109, %108 : vector<16x16xf32>
    %111 = arith.addf %105, %110 : vector<16x16xf32>
    %c3_49 = arith.constant 3 : index
    %c0_50 = arith.constant 0 : index
    %c0_51 = arith.constant 0 : index
    %112 = vector.load %arg7[%c3_49, %c0_50, %c0_51] : memref<8x16x16xf32, #tpu.memory_space<vmem>>, vector<1x16x16xf32>
    %113 = vector.shape_cast %112 : vector<1x16x16xf32> to vector<16x16xf32>
    %114 = vector.shape_cast %111 : vector<16x16xf32> to vector<1x16x16xf32>
    tpu.vector_store %arg7[%c3_49, %c0_50, %c0_51], %114 {strides = array<i32>} : memref<8x16x16xf32, #tpu.memory_space<vmem>>, vector<1x16x16xf32>,
    %c4 = arith.constant 4 : index
    %c0_52 = arith.constant 0 : index
    %115 = memref.load %arg5[%c4, %c0_52] : memref<8x4xf32, #tpu.memory_space<smem>>
    %116 = vector.extract_strided_slice %3 {offsets = [0, 0, 0], sizes = [1, 16, 16], strides = [1, 1, 1]} : vector<4x16x16xf32> to vector<1x16x16xf32>
    %117 = vector.shape_cast %116 : vector<1x16x16xf32> to vector<16x16xf32>
    %118 = vector.broadcast %115 : f32 to vector<16x16xf32>
    %119 = arith.mulf %118, %117 : vector<16x16xf32>
    %c4_53 = arith.constant 4 : index
    %c1_54 = arith.constant 1 : index
    %120 = memref.load %arg5[%c4_53, %c1_54] : memref<8x4xf32, #tpu.memory_space<smem>>
    %121 = vector.extract_strided_slice %3 {offsets = [1, 0, 0], sizes = [1, 16, 16], strides = [1, 1, 1]} : vector<4x16x16xf32> to vector<1x16x16xf32>
    %122 = vector.shape_cast %121 : vector<1x16x16xf32> to vector<16x16xf32>
    %123 = vector.broadcast %120 : f32 to vector<16x16xf32>
    %124 = arith.mulf %123, %122 : vector<16x16xf32>
    %125 = arith.addf %119, %124 : vector<16x16xf32>
    %c4_55 = arith.constant 4 : index
    %c2_56 = arith.constant 2 : index
    %126 = memref.load %arg5[%c4_55, %c2_56] : memref<8x4xf32, #tpu.memory_space<smem>>
    %127 = vector.extract_strided_slice %3 {offsets = [2, 0, 0], sizes = [1, 16, 16], strides = [1, 1, 1]} : vector<4x16x16xf32> to vector<1x16x16xf32>
    %128 = vector.shape_cast %127 : vector<1x16x16xf32> to vector<16x16xf32>
    %129 = vector.broadcast %126 : f32 to vector<16x16xf32>
    %130 = arith.mulf %129, %128 : vector<16x16xf32>
    %131 = arith.addf %125, %130 : vector<16x16xf32>
    %c4_57 = arith.constant 4 : index
    %c3_58 = arith.constant 3 : index
    %132 = memref.load %arg5[%c4_57, %c3_58] : memref<8x4xf32, #tpu.memory_space<smem>>
    %133 = vector.extract_strided_slice %3 {offsets = [3, 0, 0], sizes = [1, 16, 16], strides = [1, 1, 1]} : vector<4x16x16xf32> to vector<1x16x16xf32>
    %134 = vector.shape_cast %133 : vector<1x16x16xf32> to vector<16x16xf32>
    %135 = vector.broadcast %132 : f32 to vector<16x16xf32>
    %136 = arith.mulf %135, %134 : vector<16x16xf32>
    %137 = arith.addf %131, %136 : vector<16x16xf32>
    %c4_59 = arith.constant 4 : index
    %c0_60 = arith.constant 0 : index
    %c0_61 = arith.constant 0 : index
    %138 = vector.load %arg7[%c4_59, %c0_60, %c0_61] : memref<8x16x16xf32, #tpu.memory_space<vmem>>, vector<1x16x16xf32>
    %139 = vector.shape_cast %138 : vector<1x16x16xf32> to vector<16x16xf32>
    %140 = vector.shape_cast %137 : vector<16x16xf32> to vector<1x16x16xf32>
    tpu.vector_store %arg7[%c4_59, %c0_60, %c0_61], %140 {strides = array<i32>} : memref<8x16x16xf32, #tpu.memory_space<vmem>>, vector<1x16x16xf32>,
    %c5 = arith.constant 5 : index
    %c0_62 = arith.constant 0 : index
    %141 = memref.load %arg5[%c5, %c0_62] : memref<8x4xf32, #tpu.memory_space<smem>>
    %142 = vector.extract_strided_slice %3 {offsets = [0, 0, 0], sizes = [1, 16, 16], strides = [1, 1, 1]} : vector<4x16x16xf32> to vector<1x16x16xf32>
    %143 = vector.shape_cast %142 : vector<1x16x16xf32> to vector<16x16xf32>
    %144 = vector.broadcast %141 : f32 to vector<16x16xf32>
    %145 = arith.mulf %144, %143 : vector<16x16xf32>
    %c5_63 = arith.constant 5 : index
    %c1_64 = arith.constant 1 : index
    %146 = memref.load %arg5[%c5_63, %c1_64] : memref<8x4xf32, #tpu.memory_space<smem>>
    %147 = vector.extract_strided_slice %3 {offsets = [1, 0, 0], sizes = [1, 16, 16], strides = [1, 1, 1]} : vector<4x16x16xf32> to vector<1x16x16xf32>
    %148 = vector.shape_cast %147 : vector<1x16x16xf32> to vector<16x16xf32>
    %149 = vector.broadcast %146 : f32 to vector<16x16xf32>
    %150 = arith.mulf %149, %148 : vector<16x16xf32>
    %151 = arith.addf %145, %150 : vector<16x16xf32>
    %c5_65 = arith.constant 5 : index
    %c2_66 = arith.constant 2 : index
    %152 = memref.load %arg5[%c5_65, %c2_66] : memref<8x4xf32, #tpu.memory_space<smem>>
    %153 = vector.extract_strided_slice %3 {offsets = [2, 0, 0], sizes = [1, 16, 16], strides = [1, 1, 1]} : vector<4x16x16xf32> to vector<1x16x16xf32>
    %154 = vector.shape_cast %153 : vector<1x16x16xf32> to vector<16x16xf32>
    %155 = vector.broadcast %152 : f32 to vector<16x16xf32>
    %156 = arith.mulf %155, %154 : vector<16x16xf32>
    %157 = arith.addf %151, %156 : vector<16x16xf32>
    %c5_67 = arith.constant 5 : index
    %c3_68 = arith.constant 3 : index
    %158 = memref.load %arg5[%c5_67, %c3_68] : memref<8x4xf32, #tpu.memory_space<smem>>
    %159 = vector.extract_strided_slice %3 {offsets = [3, 0, 0], sizes = [1, 16, 16], strides = [1, 1, 1]} : vector<4x16x16xf32> to vector<1x16x16xf32>
    %160 = vector.shape_cast %159 : vector<1x16x16xf32> to vector<16x16xf32>
    %161 = vector.broadcast %158 : f32 to vector<16x16xf32>
    %162 = arith.mulf %161, %160 : vector<16x16xf32>
    %163 = arith.addf %157, %162 : vector<16x16xf32>
    %c5_69 = arith.constant 5 : index
    %c0_70 = arith.constant 0 : index
    %c0_71 = arith.constant 0 : index
    %164 = vector.load %arg7[%c5_69, %c0_70, %c0_71] : memref<8x16x16xf32, #tpu.memory_space<vmem>>, vector<1x16x16xf32>
    %165 = vector.shape_cast %164 : vector<1x16x16xf32> to vector<16x16xf32>
    %166 = vector.shape_cast %163 : vector<16x16xf32> to vector<1x16x16xf32>
    tpu.vector_store %arg7[%c5_69, %c0_70, %c0_71], %166 {strides = array<i32>} : memref<8x16x16xf32, #tpu.memory_space<vmem>>, vector<1x16x16xf32>,
    %c6 = arith.constant 6 : index
    %c0_72 = arith.constant 0 : index
    %167 = memref.load %arg5[%c6, %c0_72] : memref<8x4xf32, #tpu.memory_space<smem>>
    %168 = vector.extract_strided_slice %3 {offsets = [0, 0, 0], sizes = [1, 16, 16], strides = [1, 1, 1]} : vector<4x16x16xf32> to vector<1x16x16xf32>
    %169 = vector.shape_cast %168 : vector<1x16x16xf32> to vector<16x16xf32>
    %170 = vector.broadcast %167 : f32 to vector<16x16xf32>
    %171 = arith.mulf %170, %169 : vector<16x16xf32>
    %c6_73 = arith.constant 6 : index
    %c1_74 = arith.constant 1 : index
    %172 = memref.load %arg5[%c6_73, %c1_74] : memref<8x4xf32, #tpu.memory_space<smem>>
    %173 = vector.extract_strided_slice %3 {offsets = [1, 0, 0], sizes = [1, 16, 16], strides = [1, 1, 1]} : vector<4x16x16xf32> to vector<1x16x16xf32>
    %174 = vector.shape_cast %173 : vector<1x16x16xf32> to vector<16x16xf32>
    %175 = vector.broadcast %172 : f32 to vector<16x16xf32>
    %176 = arith.mulf %175, %174 : vector<16x16xf32>
    %177 = arith.addf %171, %176 : vector<16x16xf32>
    %c6_75 = arith.constant 6 : index
    %c2_76 = arith.constant 2 : index
    %178 = memref.load %arg5[%c6_75, %c2_76] : memref<8x4xf32, #tpu.memory_space<smem>>
    %179 = vector.extract_strided_slice %3 {offsets = [2, 0, 0], sizes = [1, 16, 16], strides = [1, 1, 1]} : vector<4x16x16xf32> to vector<1x16x16xf32>
    %180 = vector.shape_cast %179 : vector<1x16x16xf32> to vector<16x16xf32>
    %181 = vector.broadcast %178 : f32 to vector<16x16xf32>
    %182 = arith.mulf %181, %180 : vector<16x16xf32>
    %183 = arith.addf %177, %182 : vector<16x16xf32>
    %c6_77 = arith.constant 6 : index
    %c3_78 = arith.constant 3 : index
    %184 = memref.load %arg5[%c6_77, %c3_78] : memref<8x4xf32, #tpu.memory_space<smem>>
    %185 = vector.extract_strided_slice %3 {offsets = [3, 0, 0], sizes = [1, 16, 16], strides = [1, 1, 1]} : vector<4x16x16xf32> to vector<1x16x16xf32>
    %186 = vector.shape_cast %185 : vector<1x16x16xf32> to vector<16x16xf32>
    %187 = vector.broadcast %184 : f32 to vector<16x16xf32>
    %188 = arith.mulf %187, %186 : vector<16x16xf32>
    %189 = arith.addf %183, %188 : vector<16x16xf32>
    %c6_79 = arith.constant 6 : index
    %c0_80 = arith.constant 0 : index
    %c0_81 = arith.constant 0 : index
    %190 = vector.load %arg7[%c6_79, %c0_80, %c0_81] : memref<8x16x16xf32, #tpu.memory_space<vmem>>, vector<1x16x16xf32>
    %191 = vector.shape_cast %190 : vector<1x16x16xf32> to vector<16x16xf32>
    %192 = vector.shape_cast %189 : vector<16x16xf32> to vector<1x16x16xf32>
    tpu.vector_store %arg7[%c6_79, %c0_80, %c0_81], %192 {strides = array<i32>} : memref<8x16x16xf32, #tpu.memory_space<vmem>>, vector<1x16x16xf32>,
    %c7 = arith.constant 7 : index
    %c0_82 = arith.constant 0 : index
    %193 = memref.load %arg5[%c7, %c0_82] : memref<8x4xf32, #tpu.memory_space<smem>>
    %194 = vector.extract_strided_slice %3 {offsets = [0, 0, 0], sizes = [1, 16, 16], strides = [1, 1, 1]} : vector<4x16x16xf32> to vector<1x16x16xf32>
    %195 = vector.shape_cast %194 : vector<1x16x16xf32> to vector<16x16xf32>
    %196 = vector.broadcast %193 : f32 to vector<16x16xf32>
    %197 = arith.mulf %196, %195 : vector<16x16xf32>
    %c7_83 = arith.constant 7 : index
    %c1_84 = arith.constant 1 : index
    %198 = memref.load %arg5[%c7_83, %c1_84] : memref<8x4xf32, #tpu.memory_space<smem>>
    %199 = vector.extract_strided_slice %3 {offsets = [1, 0, 0], sizes = [1, 16, 16], strides = [1, 1, 1]} : vector<4x16x16xf32> to vector<1x16x16xf32>
    %200 = vector.shape_cast %199 : vector<1x16x16xf32> to vector<16x16xf32>
    %201 = vector.broadcast %198 : f32 to vector<16x16xf32>
    %202 = arith.mulf %201, %200 : vector<16x16xf32>
    %203 = arith.addf %197, %202 : vector<16x16xf32>
    %c7_85 = arith.constant 7 : index
    %c2_86 = arith.constant 2 : index
    %204 = memref.load %arg5[%c7_85, %c2_86] : memref<8x4xf32, #tpu.memory_space<smem>>
    %205 = vector.extract_strided_slice %3 {offsets = [2, 0, 0], sizes = [1, 16, 16], strides = [1, 1, 1]} : vector<4x16x16xf32> to vector<1x16x16xf32>
    %206 = vector.shape_cast %205 : vector<1x16x16xf32> to vector<16x16xf32>
    %207 = vector.broadcast %204 : f32 to vector<16x16xf32>
    %208 = arith.mulf %207, %206 : vector<16x16xf32>
    %209 = arith.addf %203, %208 : vector<16x16xf32>
    %c7_87 = arith.constant 7 : index
    %c3_88 = arith.constant 3 : index
    %210 = memref.load %arg5[%c7_87, %c3_88] : memref<8x4xf32, #tpu.memory_space<smem>>
    %211 = vector.extract_strided_slice %3 {offsets = [3, 0, 0], sizes = [1, 16, 16], strides = [1, 1, 1]} : vector<4x16x16xf32> to vector<1x16x16xf32>
    %212 = vector.shape_cast %211 : vector<1x16x16xf32> to vector<16x16xf32>
    %213 = vector.broadcast %210 : f32 to vector<16x16xf32>
    %214 = arith.mulf %213, %212 : vector<16x16xf32>
    %215 = arith.addf %209, %214 : vector<16x16xf32>
    %c7_89 = arith.constant 7 : index
    %c0_90 = arith.constant 0 : index
    %c0_91 = arith.constant 0 : index
    %216 = vector.load %arg7[%c7_89, %c0_90, %c0_91] : memref<8x16x16xf32, #tpu.memory_space<vmem>>, vector<1x16x16xf32>
    %217 = vector.shape_cast %216 : vector<1x16x16xf32> to vector<16x16xf32>
    %218 = vector.shape_cast %215 : vector<16x16xf32> to vector<1x16x16xf32>
    tpu.vector_store %arg7[%c7_89, %c0_90, %c0_91], %218 {strides = array<i32>} : memref<8x16x16xf32, #tpu.memory_space<vmem>>, vector<1x16x16xf32>,
    %c0_92 = arith.constant 0 : index
    %c0_93 = arith.constant 0 : index
    %c0_94 = arith.constant 0 : index
    %219 = vector.load %arg7[%c0_92, %c0_93, %c0_94] : memref<8x16x16xf32, #tpu.memory_space<vmem>>, vector<8x16x16xf32>
    %220 = vector.shape_cast %10 : vector<16x16xf32> to vector<1x16x16xf32>
    %cst_95 = arith.constant 0.000000e+00 : f32
    %221 = vector.broadcast %cst_95 : f32 to vector<1x16x16xf32>
    %222 = arith.cmpf ogt, %220, %221 : vector<1x16x16xf32>
    %cst_96 = arith.constant -1.000000e+10 : f32
    %223 = vector.shape_cast %222 : vector<1x16x16xi1> to vector<1x16x16xi1>
    %224 = vector.broadcast %223 : vector<1x16x16xi1> to vector<8x16x16xi1>
    %225 = vector.broadcast %cst_96 : f32 to vector<8x16x16xf32>
    %226 = arith.select %224, %219, %225 : vector<8x16x16xi1>, vector<8x16x16xf32>
    %cst_97 = arith.constant dense<0xFF800000> : vector<8x16xf32>
    %227 = vector.multi_reduction <maximumf>, %226, %cst_97 [2] : vector<8x16x16xf32> to vector<8x16xf32>
    %228 = vector.shape_cast %227 : vector<8x16xf32> to vector<8x16x1xf32>
    %229 = vector.broadcast %228 : vector<8x16x1xf32> to vector<8x16x16xf32>
    %230 = arith.subf %226, %229 : vector<8x16x16xf32>
    %231 = math.exp %230 : vector<8x16x16xf32>
    %cst_98 = arith.constant dense<0.000000e+00> : vector<8x16xf32>
    %232 = vector.multi_reduction <add>, %231, %cst_98 [2] : vector<8x16x16xf32> to vector<8x16xf32>
    %233 = vector.shape_cast %232 : vector<8x16xf32> to vector<8x16x1xf32>
    %234 = tpu.reciprocal %233 {approx = true} : vector<8x16x1xf32> -> vector<8x16x1xf32>
    %235 = vector.broadcast %234 : vector<8x16x1xf32> to vector<8x16x16xf32>
    %236 = arith.mulf %231, %235 : vector<8x16x16xf32>
    %237 = vector.shape_cast %10 : vector<16x16xf32> to vector<1x16x16xf32>
    %238 = vector.broadcast %237 : vector<1x16x16xf32> to vector<8x16x16xf32>
    %239 = arith.mulf %236, %238 : vector<8x16x16xf32>
    %cst_99 = arith.constant dense<0.000000e+00> : vector<16x16xf32>
    %240 = tpu.matmul %6, %5, %cst_99 {dimension_numbers = #tpu.dot_dimension_numbers<[1], [0], [0], [1], [0, 0, 1, 1], [], []>} : vector<16x16xf32>, vector<16x16xf32>, vector<16x16xf32> -> vector<16x16xf32>
    %241 = vector.extract_strided_slice %240 {offsets = [0, 0], sizes = [8, 16], strides = [1, 1]} : vector<16x16xf32> to vector<8x16xf32>
    %242 = vector.extract_strided_slice %240 {offsets = [8, 0], sizes = [8, 16], strides = [1, 1]} : vector<16x16xf32> to vector<8x16xf32>
    %243 = tpu.iota {dimensions = array<i32: 0>} : vector<16x16xi32>
    %244 = tpu.iota {dimensions = array<i32: 1>} : vector<16x16xi32>
    %245 = arith.cmpi eq, %243, %244 : vector<16x16xi32>
    %246 = vector.shape_cast %245 : vector<16x16xi1> to vector<1x16x16xi1>
    %247 = vector.shape_cast %241 : vector<8x16xf32> to vector<8x1x16xf32>
    %248 = vector.shape_cast %242 : vector<8x16xf32> to vector<8x1x16xf32>
    %249 = vector.shape_cast %246 : vector<1x16x16xi1> to vector<1x16x16xi1>
    %250 = vector.broadcast %249 : vector<1x16x16xi1> to vector<8x16x16xi1>
    %251 = vector.shape_cast %247 : vector<8x1x16xf32> to vector<8x1x16xf32>
    %252 = vector.broadcast %251 : vector<8x1x16xf32> to vector<8x16x16xf32>
    %253 = vector.shape_cast %248 : vector<8x1x16xf32> to vector<8x1x16xf32>
    %254 = vector.broadcast %253 : vector<8x1x16xf32> to vector<8x16x16xf32>
    %255 = arith.select %250, %252, %254 : vector<8x16x16xi1>, vector<8x16x16xf32>
    %256 = arith.mulf %239, %255 : vector<8x16x16xf32>
    %cst_100 = arith.constant dense<0.000000e+00> : vector<8x16xf32>
    %257 = vector.multi_reduction <add>, %256, %cst_100 [2] : vector<8x16x16xf32> to vector<8x16xf32>
    %c0_101 = arith.constant 0 : index
    %c0_102 = arith.constant 0 : index
    %c0_103 = arith.constant 0 : index
    %258 = vector.load %arg6[%c0_101, %c0_102, %c0_103] : memref<1x8x16xf32, #tpu.memory_space<vmem>>, vector<1x8x16xf32>
    %259 = vector.shape_cast %258 : vector<1x8x16xf32> to vector<8x16xf32>
    %260 = vector.shape_cast %257 : vector<8x16xf32> to vector<1x8x16xf32>
    tpu.vector_store %arg6[%c0_101, %c0_102, %c0_103], %260 {strides = array<i32>} : memref<1x8x16xf32, #tpu.memory_space<vmem>>, vector<1x8x16xf32>,
    return
  }
  func.func @transform_0(%arg0: i32) -> (i32, i32, i32) {
    %c0_i32 = arith.constant 0 : i32
    %c0_i32_0 = arith.constant 0 : i32
    %c0_i32_1 = arith.constant 0 : i32
    return %arg0, %c0_i32, %c0_i32_0 : i32, i32, i32
  }
  func.func @transform_1(%arg0: i32) -> (i32, i32, i32, i32) {
    %c0_i32 = arith.constant 0 : i32
    %c0_i32_0 = arith.constant 0 : i32
    %c0_i32_1 = arith.constant 0 : i32
    %c0_i32_2 = arith.constant 0 : i32
    return %arg0, %c0_i32, %c0_i32_0, %c0_i32_1 : i32, i32, i32, i32
  }
  func.func @transform_2(%arg0: i32) -> (i32, i32, i32) {
    %c0_i32 = arith.constant 0 : i32
    %c0_i32_0 = arith.constant 0 : i32
    %c0_i32_1 = arith.constant 0 : i32
    return %arg0, %c0_i32, %c0_i32_0 : i32, i32, i32
  }
  func.func @transform_3(%arg0: i32) -> (i32, i32) {
    %c0_i32 = arith.constant 0 : i32
    %c0_i32_0 = arith.constant 0 : i32
    %c0_i32_1 = arith.constant 0 : i32
    return %c0_i32, %c0_i32_0 : i32, i32
  }
  func.func @transform_4(%arg0: i32) -> (i32, i32) {
    %c0_i32 = arith.constant 0 : i32
    %c0_i32_0 = arith.constant 0 : i32
    %c0_i32_1 = arith.constant 0 : i32
    return %c0_i32, %c0_i32_0 : i32, i32
  }
  func.func @transform_5(%arg0: i32) -> (i32, i32, i32) {
    %c0_i32 = arith.constant 0 : i32
    %c0_i32_0 = arith.constant 0 : i32
    %c0_i32_1 = arith.constant 0 : i32
    return %arg0, %c0_i32, %c0_i32_0 : i32, i32, i32
  }
}

</mosaic_0001>

<llo_original>
// kernel: graph_conv.1
$region0: #{graph_conv.1}
  #allocation0 [shape = 'u32[]', space=smem, size = 0x4, offset = 0x4, fixed_abs, tag = 'smem constant byte address 0x4 - core index']
  #allocation1 [shape = 'u32[144,128]{1,0:T(1,128)}', space=vmem, size = 0x12000, scoped, tag = 'internal scratch']
  #allocation2 [shape = 'f32[8,16,16]{2,1,0:T(8,128)}', space=vmem, size = 0x10000, scoped, tag = 'scratch operand']
  %s0 = inlined_call_operand.vmem [shape: f32[2,16,16], index: 0, kind: input, shape index: {}]
  %s1 = inlined_call_operand.hbm [shape: f32[2,4,16,16], index: 1, kind: input, shape index: {}]
  %s2 = inlined_call_operand.hbm [shape: f32[2,16,16], index: 2, kind: input, shape index: {}]
  %s3 = inlined_call_operand.vmem [shape: f32[16,16], index: 3, kind: input, shape index: {}]
  %s4 = inlined_call_operand.vmem [shape: f32[8,4], index: 4, kind: input, shape index: {}]
  %s5 = inlined_call_operand.hbm [shape: f32[2,8,16], index: 5, kind: output, shape index: {}]
  %s6 = sld [smem:[#allocation0]]
  $region65: #{graph_conv.1} parent=0
    _
  %s8 = ssub.s32 1, %s6
  %s9 = scalar_select 0, %s8, %s6
  $region1: #{graph_conv.1} parent=0
    #allocation3 [shape = 'u8[65536]{0}', space=vmem, size = 0x10000, scoped, tag = 'input window, operand 1']
    #allocation4 [shape = 's32[2]{0}', space=sflag, size = 0x8, scoped, tag = 'scoped memory for graph_conv.1']
    #allocation5 [shape = 's32[2]{0}', space=sflag, size = 0x8, scoped, tag = 'scoped memory for graph_conv.1']
    #allocation6 [shape = 's32[2]{0}', space=sflag, size = 0x8, scoped, tag = 'scoped memory for graph_conv.1']
    #allocation7 [shape = 'u8[16384]{0}', space=vmem, size = 0x4000, scoped, tag = 'input window, operand 2']
    #allocation8 [shape = 's32[2]{0}', space=sflag, size = 0x8, scoped, tag = 'scoped memory for graph_conv.1']
    #allocation9 [shape = 'u8[4096]{0}', space=smem, size = 0x1000, scoped, tag = 'input window, operand 4, single buffered']
    #allocation10 [shape = 'u8[8192]{0}', space=vmem, size = 0x2000, scoped, tag = 'output window, operand 0']
    %10 = vsyncpa [#allocation4], 0
    %s11 = scalar_lea.sflag [#allocation4], 1
    %12 = vsyncpa %s11, 0
    %13 = vsyncpa [#allocation8], 0
    %s14 = scalar_lea.sflag [#allocation8], 1
    %15 = vsyncpa %s14, 0
    %16 = vsyncpa [#allocation6], 0
    %17 = vsyncpa [#allocation5], 0
    %s18 = scalar_lea.sflag [#allocation5], 1
    %19 = vsyncpa %s18, 0
    loop: start=0, step=1, limit=4
    $region2: #{graph_conv.1} parent=1 // loop_pre_header
      _
    $region3: #{graph_conv.1} parent=1 // loop_header
      %s21 = sphi 0, %s25
      %p22 = scmp.ge.s32.totalorder %s21, 4
      %s31 = sphi 0, %s33
      %s34 = sphi 0, %s31
      %s35 = sphi 0, %s34
      %s51 = sphi 0, %s35
      %s57 = sphi 0, %s59
      %s60 = sphi 0, %s57
      %s61 = sphi 0, %s60
      %s77 = sphi 0, %s61
      %s83 = sphi 0, %s85
      %s86 = sphi 0, %s83
      %s87 = sphi 0, %s86
      %s103 = sphi 0, %s87
      %s107 = sphi 0, %s107
      %s109 = sphi 0, %s107
      %s110 = sphi 0, %s109
      %s124 = sphi 0, %s110
      %s128 = sphi 0, %s128
      %s130 = sphi 0, %s128
      %s131 = sphi 0, %s130
      %s145 = sphi 0, %s131
      %s151 = sphi 0, %s153
      %s154 = sphi 0, %s151
      %s155 = sphi 0, %s154
      %s171 = sphi 0, %s155
    $region4: #{graph_conv.1} parent=1 // loop_header_branch
      %24 = sbr.rel (%p22) target = $region8
    $region5: #{graph_conv.1} parent=1 // loop_body
      %s26 = ssub.s32 %s21, 1
      %s27 = ssub.s32 %s21, 2
      %s28 = sadd.s32 %s21, 1
      %s29 = ssub.s32 %s21, %s28
      %p30 = scmp.eq.s32.totalorder %s29, 0
      %s32 = sadd.s32 %s31, 1
      %s33 = scalar_select %p30, %s31, %s32
      %p36 = pneg %p30
      %p37 = scmp.eq.s32.totalorder %s21, 1
      %p38 = por %p36, %p37
      %p39 = scmp.ne.s32.totalorder %s31, %s34
      %p40 = scmp.eq.s32.totalorder %s21, 0
      %p41 = por %p39, %p40
      %p42 = scmp.ne.s32.totalorder %s31, %s34
      %p43 = scmp.eq.s32.totalorder %s26, 1
      %p44 = por %p42, %p43
      %p45 = scmp.ne.s32.totalorder %s34, %s35
      %p46 = scmp.eq.s32.totalorder %s26, 0
      %p47 = por %p45, %p46
      %p48 = scmp.ne.s32.totalorder %s34, %s35
      %p49 = scmp.eq.s32.totalorder %s27, 1
      %p50 = por %p48, %p49
      %p52 = scmp.ne.s32.totalorder %s35, %s51
      %p53 = scmp.eq.s32.totalorder %s27, 0
      %p54 = por %p52, %p53
      %s55 = ssub.s32 %s21, %s28
      %p56 = scmp.eq.s32.totalorder %s55, 0
      %s58 = sadd.s32 %s57, 1
      %s59 = scalar_select %p56, %s57, %s58
      %p62 = pneg %p56
      %p63 = scmp.eq.s32.totalorder %s21, 1
      %p64 = por %p62, %p63
      %p65 = scmp.ne.s32.totalorder %s57, %s60
      %p66 = scmp.eq.s32.totalorder %s21, 0
      %p67 = por %p65, %p66
      %p68 = scmp.ne.s32.totalorder %s57, %s60
      %p69 = scmp.eq.s32.totalorder %s26, 1
      %p70 = por %p68, %p69
      %p71 = scmp.ne.s32.totalorder %s60, %s61
      %p72 = scmp.eq.s32.totalorder %s26, 0
      %p73 = por %p71, %p72
      %p74 = scmp.ne.s32.totalorder %s60, %s61
      %p75 = scmp.eq.s32.totalorder %s27, 1
      %p76 = por %p74, %p75
      %p78 = scmp.ne.s32.totalorder %s61, %s77
      %p79 = scmp.eq.s32.totalorder %s27, 0
      %p80 = por %p78, %p79
      %s81 = ssub.s32 %s21, %s28
      %p82 = scmp.eq.s32.totalorder %s81, 0
      %s84 = sadd.s32 %s83, 1
      %s85 = scalar_select %p82, %s83, %s84
      %p88 = pneg %p82
      %p89 = scmp.eq.s32.totalorder %s21, 1
      %p90 = por %p88, %p89
      %p91 = scmp.ne.s32.totalorder %s83, %s86
      %p92 = scmp.eq.s32.totalorder %s21, 0
      %p93 = por %p91, %p92
      %p94 = scmp.ne.s32.totalorder %s83, %s86
      %p95 = scmp.eq.s32.totalorder %s26, 1
      %p96 = por %p94, %p95
      %p97 = scmp.ne.s32.totalorder %s86, %s87
      %p98 = scmp.eq.s32.totalorder %s26, 0
      %p99 = por %p97, %p98
      %p100 = scmp.ne.s32.totalorder %s86, %s87
      %p101 = scmp.eq.s32.totalorder %s27, 1
      %p102 = por %p100, %p101
      %p104 = scmp.ne.s32.totalorder %s87, %s103
      %p105 = scmp.eq.s32.totalorder %s27, 0
      %p106 = por %p104, %p105
      %s108 = sadd.s32 %s107, 1
      %p111 = scmp.eq.s32.totalorder %s21, 1
      %p112 = scmp.ne.s32.totalorder %s107, %s109
      %p113 = scmp.eq.s32.totalorder %s21, 0
      %p114 = por %p112, %p113
      %p115 = scmp.ne.s32.totalorder %s107, %s109
      %p116 = scmp.eq.s32.totalorder %s26, 1
      %p117 = por %p115, %p116
      %p118 = scmp.ne.s32.totalorder %s109, %s110
      %p119 = scmp.eq.s32.totalorder %s26, 0
      %p120 = por %p118, %p119
      %p121 = scmp.ne.s32.totalorder %s109, %s110
      %p122 = scmp.eq.s32.totalorder %s27, 1
      %p123 = por %p121, %p122
      %p125 = scmp.ne.s32.totalorder %s110, %s124
      %p126 = scmp.eq.s32.totalorder %s27, 0
      %p127 = por %p125, %p126
      %s129 = sadd.s32 %s128, 1
      %p132 = scmp.eq.s32.totalorder %s21, 1
      %p133 = scmp.ne.s32.totalorder %s128, %s130
      %p134 = scmp.eq.s32.totalorder %s21, 0
      %p135 = por %p133, %p134
      %p136 = scmp.ne.s32.totalorder %s128, %s130
      %p137 = scmp.eq.s32.totalorder %s26, 1
      %p138 = por %p136, %p137
      %p139 = scmp.ne.s32.totalorder %s130, %s131
      %p140 = scmp.eq.s32.totalorder %s26, 0
      %p141 = por %p139, %p140
      %p142 = scmp.ne.s32.totalorder %s130, %s131
      %p143 = scmp.eq.s32.totalorder %s27, 1
      %p144 = por %p142, %p143
      %p146 = scmp.ne.s32.totalorder %s131, %s145
      %p147 = scmp.eq.s32.totalorder %s27, 0
      %p148 = por %p146, %p147
      %s149 = ssub.s32 %s21, %s28
      %p150 = scmp.eq.s32.totalorder %s149, 0
      %s152 = sadd.s32 %s151, 1
      %s153 = scalar_select %p150, %s151, %s152
      %p156 = pneg %p150
      %p157 = scmp.eq.s32.totalorder %s21, 1
      %p158 = por %p156, %p157
      %p159 = scmp.ne.s32.totalorder %s151, %s154
      %p160 = scmp.eq.s32.totalorder %s21, 0
      %p161 = por %p159, %p160
      %p162 = scmp.ne.s32.totalorder %s151, %s154
      %p163 = scmp.eq.s32.totalorder %s26, 1
      %p164 = por %p162, %p163
      %p165 = scmp.ne.s32.totalorder %s154, %s155
      %p166 = scmp.eq.s32.totalorder %s26, 0
      %p167 = por %p165, %p166
      %p168 = scmp.ne.s32.totalorder %s154, %s155
      %p169 = scmp.eq.s32.totalorder %s27, 1
      %p170 = por %p168, %p169
      %p172 = scmp.ne.s32.totalorder %s155, %s171
      %p173 = scmp.eq.s32.totalorder %s27, 0
      %p174 = por %p172, %p173
      %p175 = scmp.le.s32.totalorder 1, %s21
      %p176 = scmp.lt.s32.totalorder %s21, 3
      %p177 = pnand %p175, %p176
      %p178 = pneg %p177
      // Predicated region
      $region9: #{graph_conv.1} parent=5 // pred_check
        _
      $region10: #{graph_conv.1} parent=5 // pred_check_branch
        %180 = sbr.rel (%p177) target = $region12
      $region11: #{graph_conv.1} parent=5 // pred_region
        %s181 = ssub.s32 %s21, 1
        // Predicated region
        $region13: #{graph_conv.1} parent=11 // pred_check
          %p182 = pneg %p120
        $region14: #{graph_conv.1} parent=11 // pred_check_branch
          %184 = sbr.rel (%p182) target = $region16
        $region15: #{graph_conv.1} parent=11 // pred_region
          _
        $region16: #{graph_conv.1} parent=11 // pred_fallthru
          _
        // Predicated region
        $region17: #{graph_conv.1} parent=11 // pred_check
          %p185 = pneg %p141
        $region18: #{graph_conv.1} parent=11 // pred_check_branch
          %187 = sbr.rel (%p185) target = $region20
        $region19: #{graph_conv.1} parent=11 // pred_region
          %s189 = ssub.s32 128, 128
          %190 = vsyncadd [#allocation6], %s189
          %s192 = sshll.u32 %s4, 4
          %s193 = int_to_ptr.vmem [resolvable:$true] %s192
          %195 = dma.vmem_to_smem %s193, 128, [#allocation9], [#allocation6]
        $region20: #{graph_conv.1} parent=11 // pred_fallthru
          _
      $region12: #{graph_conv.1} parent=5 // pred_fallthru
        _
      %p196 = scmp.lt.s32.totalorder %s21, 2
      // Predicated region
      $region21: #{graph_conv.1} parent=5 // pred_check
        %p197 = pneg %p196
      $region22: #{graph_conv.1} parent=5 // pred_check_branch
        %199 = sbr.rel (%p197) target = $region24
      $region23: #{graph_conv.1} parent=5 // pred_region
        // Predicated region
        $region25: #{graph_conv.1} parent=23 // pred_check
          %p200 = pneg %p41
        $region26: #{graph_conv.1} parent=23 // pred_check_branch
          %202 = sbr.rel (%p200) target = $region28
        $region27: #{graph_conv.1} parent=23 // pred_region
          %p203 = scmp.lt.s32.totalorder %s21, 1
          %s204 = scalar_select %p203, %s21, 1
          %s205 = smul.addr %s204, 2
          %s206 = smul.addr %s205, 8
          %s207 = scalar_lea.vmem %s0, %s206
        $region28: #{graph_conv.1} parent=23 // pred_fallthru
          _
        // Predicated region
        $region29: #{graph_conv.1} parent=23 // pred_check
          %p208 = pneg %p67
        $region30: #{graph_conv.1} parent=23 // pred_check_branch
          %210 = sbr.rel (%p208) target = $region32
        $region31: #{graph_conv.1} parent=23 // pred_region
          %s211 = sand.u32 %s57, 1
          %s212 = scalar_lea.sflag [#allocation4], %s211
          %s213 = sand.u32 %s57, 1
          %s214 = smul.addr %s213, 64
          %s215 = scalar_lea.vmem [#allocation3], %s214
          %s217 = ssub.s32 1024, 1024
          %218 = vsyncadd %s212, %s217
          %s219 = smul.addr %s21, 8
          %s220 = smul.addr %s219, 128
          %s221 = scalar_lea.hbm %s1, %s220
          %s222 = sshll.u32 %s215, 4
          %s223 = int_to_ptr.vmem [resolvable:$true] %s222
          %228 = dma.hbm_to_vmem [thread:$0]  %s221, 1024, %s223, %s212, 128, 128, 8
        $region32: #{graph_conv.1} parent=23 // pred_fallthru
          _
        // Predicated region
        $region33: #{graph_conv.1} parent=23 // pred_check
          %p229 = pneg %p93
        $region34: #{graph_conv.1} parent=23 // pred_check_branch
          %231 = sbr.rel (%p229) target = $region36
        $region35: #{graph_conv.1} parent=23 // pred_region
          %s232 = sand.u32 %s83, 1
          %s233 = scalar_lea.sflag [#allocation8], %s232
          %s234 = sand.u32 %s83, 1
          %s235 = smul.addr %s234, 16
          %s236 = scalar_lea.vmem [#allocation7], %s235
          %s238 = ssub.s32 256, 256
          %239 = vsyncadd %s233, %s238
          %s240 = smul.addr %s21, 2
          %s241 = smul.addr %s240, 128
          %s242 = scalar_lea.hbm %s2, %s241
          %s243 = sshll.u32 %s236, 4
          %s244 = int_to_ptr.vmem [resolvable:$true] %s243
          %249 = dma.hbm_to_vmem [thread:$0]  %s242, 256, %s244, %s233, 128, 128, 8
        $region36: #{graph_conv.1} parent=23 // pred_fallthru
          _
      $region24: #{graph_conv.1} parent=5 // pred_fallthru
        _
      %p250 = scmp.le.s32.totalorder 1, %s21
      %p251 = scmp.lt.s32.totalorder %s21, 3
      %p252 = pnand %p250, %p251
      %p253 = pneg %p252
      // Predicated region
      $region37: #{graph_conv.1} parent=5 // pred_check
        _
      $region38: #{graph_conv.1} parent=5 // pred_check_branch
        %255 = sbr.rel (%p252) target = $region40
      $region39: #{graph_conv.1} parent=5 // pred_region
        %s256 = ssub.s32 %s21, 1
        %s257 = sand.u32 %s60, 1
        %s258 = scalar_lea.sflag [#allocation4], %s257
        %s259 = sand.u32 %s60, 1
        %s260 = smul.addr %s259, 64
        %s261 = scalar_lea.vmem [#allocation3], %s260
        // Predicated region
        $region41: #{graph_conv.1} parent=39 // pred_check
          %p262 = pneg %p73
        $region42: #{graph_conv.1} parent=39 // pred_check_branch
          %264 = sbr.rel (%p262) target = $region44
        $region43: #{graph_conv.1} parent=39 // pred_region
          %265 = dma.done %s258, 1024
        $region44: #{graph_conv.1} parent=39 // pred_fallthru
          _
        %s266 = sand.u32 %s86, 1
        %s267 = scalar_lea.sflag [#allocation8], %s266
        %s268 = sand.u32 %s86, 1
        %s269 = smul.addr %s268, 16
        %s270 = scalar_lea.vmem [#allocation7], %s269
        // Predicated region
        $region45: #{graph_conv.1} parent=39 // pred_check
          %p271 = pneg %p99
        $region46: #{graph_conv.1} parent=39 // pred_check_branch
          %273 = sbr.rel (%p271) target = $region48
        $region47: #{graph_conv.1} parent=39 // pred_region
          %274 = dma.done %s267, 256
        $region48: #{graph_conv.1} parent=39 // pred_fallthru
          _
        // Predicated region
        $region49: #{graph_conv.1} parent=39 // pred_check
          %p275 = pneg %p141
        $region50: #{graph_conv.1} parent=39 // pred_check_branch
          %277 = sbr.rel (%p275) target = $region52
        $region51: #{graph_conv.1} parent=39 // pred_region
          %278 = dma.done [#allocation6], 128
        $region52: #{graph_conv.1} parent=39 // pred_fallthru
          _
        %279 = sfence
        %p280 = scmp.lt.s32.totalorder %s26, 1
        %s281 = scalar_select %p280, %s26, 1
        %s282 = smul.addr %s281, 2
        %s283 = smul.addr %s282, 8
        %s284 = scalar_lea.vmem %s0, %s283
        %p285 = pneg %p47
        %p286 = pneg %p44
        %s287 = sand.u32 %s60, 1
        %s288 = scalar_lea.sflag [#allocation4], %s287
        %s289 = sand.u32 %s60, 1
        %s290 = smul.addr %s289, 64
        %s291 = scalar_lea.vmem [#allocation3], %s290
        %p292 = pneg %p73
        %p293 = pneg %p70
        %s294 = sand.u32 %s86, 1
        %s295 = scalar_lea.sflag [#allocation8], %s294
        %s296 = sand.u32 %s86, 1
        %s297 = smul.addr %s296, 16
        %s298 = scalar_lea.vmem [#allocation7], %s297
        %p299 = pneg %p99
        %p300 = pneg %p96
        %p301 = pneg %p120
        %p302 = pneg %p117
        %p303 = pneg %p141
        %p304 = pneg %p138
        %p305 = pneg %p167
        %p306 = pneg %p164
        %s307 = sand.u32 %s154, 1
        %s308 = scalar_lea.sflag [#allocation5], %s307
        %s309 = sand.u32 %s154, 1
        %s310 = smul.addr %s309, 8
        %s311 = scalar_lea.vmem [#allocation10], %s310
        %p312 = scmp.lt.s32.totalorder %s26, 1
        %s313 = scalar_select %p312, %s26, 1
        %s314 = smul.addr %s313, 2
        %s315 = smul.addr %s314, 8
        %s316 = scalar_lea.vmem %s0, %s315
        %v317 = vld [vmem:[%s316] sm:$0xff]
        %v318 = vld [vmem:[%s316 + $0x8] sm:$0xff]
        %v319 = vld [vmem:[%s261] sm:$0xff]
        %v320 = vld [vmem:[%s261 + $0x8] sm:$0xff]
        %v321 = vld [vmem:[%s261 + $0x10] sm:$0xff]
        %v322 = vld [vmem:[%s261 + $0x18] sm:$0xff]
        %v323 = vld [vmem:[%s261 + $0x20] sm:$0xff]
        %v324 = vld [vmem:[%s261 + $0x28] sm:$0xff]
        %v325 = vld [vmem:[%s261 + $0x30] sm:$0xff]
        %v326 = vld [vmem:[%s261 + $0x38] sm:$0xff]
        %v327 = vld [vmem:[%s270] sm:$0xff]
        %v328 = vld [vmem:[%s270 + $0x8] sm:$0xff]
        %v329 = vld [vmem:[%s3] sm:$0xff]
        %v330 = vld [vmem:[%s3 + $0x8] sm:$0xff]
        %vm331 = vcmp.eq.f32.partialorder %v317, 1.0
        %vm332 = vcmp.eq.f32.partialorder %v318, 1.0
        %v333 = vsel %vm331, 1, 0
        %v334 = vsel %vm332, 1, 0
        %v335 = vcvt.s32.f32 %v333
        %v336 = vcvt.s32.f32 %v334
        %s337 = sld [smem:[#allocation9]]
        %v338 = vstv %s337
        %v339 = vmul.f32 %v338, %v319
        %v340 = vmul.f32 %v338, %v320
        %s341 = sld [smem:[#allocation9 + $0x1]]
        %v342 = vstv %s341
        %v343 = vmul.f32 %v342, %v321
        %v344 = vmul.f32 %v342, %v322
        %v345 = vadd.f32 %v339, %v343
        %v346 = vadd.f32 %v340, %v344
        %s347 = sld [smem:[#allocation9 + $0x2]]
        %v348 = vstv %s347
        %v349 = vmul.f32 %v348, %v323
        %v350 = vmul.f32 %v348, %v324
        %v351 = vadd.f32 %v345, %v349
        %v352 = vadd.f32 %v346, %v350
        %s353 = sld [smem:[#allocation9 + $0x3]]
        %v354 = vstv %s353
        %v355 = vmul.f32 %v354, %v325
        %v356 = vmul.f32 %v354, %v326
        %v357 = vadd.f32 %v351, %v355
        %v358 = vadd.f32 %v352, %v356
        %vm359 = vcmask 130048
        %360 = vst.msk [vmem:[#allocation2] sm:$0xff] %vm359, %v357
        %361 = vst.msk [vmem:[#allocation2 + $0x8] sm:$0xff] %vm359, %v358
        %s362 = sld [smem:[#allocation9 + $0x80]]
        %v363 = vstv %s362
        %v364 = vmul.f32 %v363, %v319
        %v365 = vmul.f32 %v363, %v320
        %s366 = sld [smem:[#allocation9 + $0x81]]
        %v367 = vstv %s366
        %v368 = vmul.f32 %v367, %v321
        %v369 = vmul.f32 %v367, %v322
        %v370 = vadd.f32 %v364, %v368
        %v371 = vadd.f32 %v365, %v369
        %s372 = sld [smem:[#allocation9 + $0x82]]
        %v373 = vstv %s372
        %v374 = vmul.f32 %v373, %v323
        %v375 = vmul.f32 %v373, %v324
        %v376 = vadd.f32 %v370, %v374
        %v377 = vadd.f32 %v371, %v375
        %s378 = sld [smem:[#allocation9 + $0x83]]
        %v379 = vstv %s378
        %v380 = vmul.f32 %v379, %v325
        %v381 = vmul.f32 %v379, %v326
        %v382 = vadd.f32 %v376, %v380
        %v383 = vadd.f32 %v377, %v381
        %s384 = scalar_lea.vmem [#allocation2], 16
        %385 = vst.msk [vmem:[%s384] sm:$0xff] %vm359, %v382
        %386 = vst.msk [vmem:[%s384 + $0x8] sm:$0xff] %vm359, %v383
        %s387 = sld [smem:[#allocation9 + $0x100]]
        %v388 = vstv %s387
        %v389 = vmul.f32 %v388, %v319
        %v390 = vmul.f32 %v388, %v320
        %s391 = sld [smem:[#allocation9 + $0x101]]
        %v392 = vstv %s391
        %v393 = vmul.f32 %v392, %v321
        %v394 = vmul.f32 %v392, %v322
        %v395 = vadd.f32 %v389, %v393
        %v396 = vadd.f32 %v390, %v394
        %s397 = sld [smem:[#allocation9 + $0x102]]
        %v398 = vstv %s397
        %v399 = vmul.f32 %v398, %v323
        %v400 = vmul.f32 %v398, %v324
        %v401 = vadd.f32 %v395, %v399
        %v402 = vadd.f32 %v396, %v400
        %s403 = sld [smem:[#allocation9 + $0x103]]
        %v404 = vstv %s403
        %v405 = vmul.f32 %v404, %v325
        %v406 = vmul.f32 %v404, %v326
        %v407 = vadd.f32 %v401, %v405
        %v408 = vadd.f32 %v402, %v406
        %s409 = scalar_lea.vmem [#allocation2], 32
        %410 = vst.msk [vmem:[%s409] sm:$0xff] %vm359, %v407
        %411 = vst.msk [vmem:[%s409 + $0x8] sm:$0xff] %vm359, %v408
        %s412 = sld [smem:[#allocation9 + $0x180]]
        %v413 = vstv %s412
        %v414 = vmul.f32 %v413, %v319
        %v415 = vmul.f32 %v413, %v320
        %s416 = sld [smem:[#allocation9 + $0x181]]
        %v417 = vstv %s416
        %v418 = vmul.f32 %v417, %v321
        %v419 = vmul.f32 %v417, %v322
        %v420 = vadd.f32 %v414, %v418
        %v421 = vadd.f32 %v415, %v419
        %s422 = sld [smem:[#allocation9 + $0x182]]
        %v423 = vstv %s422
        %v424 = vmul.f32 %v423, %v323
        %v425 = vmul.f32 %v423, %v324
        %v426 = vadd.f32 %v420, %v424
        %v427 = vadd.f32 %v421, %v425
        %s428 = sld [smem:[#allocation9 + $0x183]]
        %v429 = vstv %s428
        %v430 = vmul.f32 %v429, %v325
        %v431 = vmul.f32 %v429, %v326
        %v432 = vadd.f32 %v426, %v430
        %v433 = vadd.f32 %v427, %v431
        %s434 = scalar_lea.vmem [#allocation2], 48
        %435 = vst.msk [vmem:[%s434] sm:$0xff] %vm359, %v432
        %436 = vst.msk [vmem:[%s434 + $0x8] sm:$0xff] %vm359, %v433
        %s437 = sld [smem:[#allocation9 + $0x200]]
        %v438 = vstv %s437
        %v439 = vmul.f32 %v438, %v319
        %v440 = vmul.f32 %v438, %v320
        %s441 = sld [smem:[#allocation9 + $0x201]]
        %v442 = vstv %s441
        %v443 = vmul.f32 %v442, %v321
        %v444 = vmul.f32 %v442, %v322
        %v445 = vadd.f32 %v439, %v443
        %v446 = vadd.f32 %v440, %v444
        %s447 = sld [smem:[#allocation9 + $0x202]]
        %v448 = vstv %s447
        %v449 = vmul.f32 %v448, %v323
        %v450 = vmul.f32 %v448, %v324
        %v451 = vadd.f32 %v445, %v449
        %v452 = vadd.f32 %v446, %v450
        %s453 = sld [smem:[#allocation9 + $0x203]]
        %v454 = vstv %s453
        %v455 = vmul.f32 %v454, %v325
        %v456 = vmul.f32 %v454, %v326
        %v457 = vadd.f32 %v451, %v455
        %v458 = vadd.f32 %v452, %v456
        %s459 = scalar_lea.vmem [#allocation2], 64
        %460 = vst.msk [vmem:[%s459] sm:$0xff] %vm359, %v457
        %461 = vst.msk [vmem:[%s459 + $0x8] sm:$0xff] %vm359, %v458
        %s462 = sld [smem:[#allocation9 + $0x280]]
        %v463 = vstv %s462
        %v464 = vmul.f32 %v463, %v319
        %v465 = vmul.f32 %v463, %v320
        %s466 = sld [smem:[#allocation9 + $0x281]]
        %v467 = vstv %s466
        %v468 = vmul.f32 %v467, %v321
        %v469 = vmul.f32 %v467, %v322
        %v470 = vadd.f32 %v464, %v468
        %v471 = vadd.f32 %v465, %v469
        %s472 = sld [smem:[#allocation9 + $0x282]]
        %v473 = vstv %s472
        %v474 = vmul.f32 %v473, %v323
        %v475 = vmul.f32 %v473, %v324
        %v476 = vadd.f32 %v470, %v474
        %v477 = vadd.f32 %v471, %v475
        %s478 = sld [smem:[#allocation9 + $0x283]]
        %v479 = vstv %s478
        %v480 = vmul.f32 %v479, %v325
        %v481 = vmul.f32 %v479, %v326
        %v482 = vadd.f32 %v476, %v480
        %v483 = vadd.f32 %v477, %v481
        %s484 = scalar_lea.vmem [#allocation2], 80
        %485 = vst.msk [vmem:[%s484] sm:$0xff] %vm359, %v482
        %486 = vst.msk [vmem:[%s484 + $0x8] sm:$0xff] %vm359, %v483
        %s487 = sld [smem:[#allocation9 + $0x300]]
        %v488 = vstv %s487
        %v489 = vmul.f32 %v488, %v319
        %v490 = vmul.f32 %v488, %v320
        %s491 = sld [smem:[#allocation9 + $0x301]]
        %v492 = vstv %s491
        %v493 = vmul.f32 %v492, %v321
        %v494 = vmul.f32 %v492, %v322
        %v495 = vadd.f32 %v489, %v493
        %v496 = vadd.f32 %v490, %v494
        %s497 = sld [smem:[#allocation9 + $0x302]]
        %v498 = vstv %s497
        %v499 = vmul.f32 %v498, %v323
        %v500 = vmul.f32 %v498, %v324
        %v501 = vadd.f32 %v495, %v499
        %v502 = vadd.f32 %v496, %v500
        %s503 = sld [smem:[#allocation9 + $0x303]]
        %v504 = vstv %s503
        %v505 = vmul.f32 %v504, %v325
        %v506 = vmul.f32 %v504, %v326
        %v507 = vadd.f32 %v501, %v505
        %v508 = vadd.f32 %v502, %v506
        %s509 = scalar_lea.vmem [#allocation2], 96
        %510 = vst.msk [vmem:[%s509] sm:$0xff] %vm359, %v507
        %511 = vst.msk [vmem:[%s509 + $0x8] sm:$0xff] %vm359, %v508
        %s512 = sld [smem:[#allocation9 + $0x380]]
        %v513 = vstv %s512
        %v514 = vmul.f32 %v513, %v319
        %v515 = vmul.f32 %v513, %v320
        %s516 = sld [smem:[#allocation9 + $0x381]]
        %v517 = vstv %s516
        %v518 = vmul.f32 %v517, %v321
        %v519 = vmul.f32 %v517, %v322
        %v520 = vadd.f32 %v514, %v518
        %v521 = vadd.f32 %v515, %v519
        %s522 = sld [smem:[#allocation9 + $0x382]]
        %v523 = vstv %s522
        %v524 = vmul.f32 %v523, %v323
        %v525 = vmul.f32 %v523, %v324
        %v526 = vadd.f32 %v520, %v524
        %v527 = vadd.f32 %v521, %v525
        %s528 = sld [smem:[#allocation9 + $0x383]]
        %v529 = vstv %s528
        %v530 = vmul.f32 %v529, %v325
        %v531 = vmul.f32 %v529, %v326
        %v532 = vadd.f32 %v526, %v530
        %v533 = vadd.f32 %v527, %v531
        %s534 = scalar_lea.vmem [#allocation2], 112
        %535 = vst.msk [vmem:[%s534] sm:$0xff] %vm359, %v532
        %536 = vst.msk [vmem:[%s534 + $0x8] sm:$0xff] %vm359, %v533
        %v537 = vld [vmem:[#allocation2] sm:$0xff]
        %v538 = vld [vmem:[#allocation2 + $0x8] sm:$0xff]
        %v539 = vld [vmem:[#allocation2 + $0x10] sm:$0xff]
        %v540 = vld [vmem:[#allocation2 + $0x18] sm:$0xff]
        %v541 = vld [vmem:[#allocation2 + $0x20] sm:$0xff]
        %v542 = vld [vmem:[#allocation2 + $0x28] sm:$0xff]
        %v543 = vld [vmem:[#allocation2 + $0x30] sm:$0xff]
        %v544 = vld [vmem:[#allocation2 + $0x38] sm:$0xff]
        %v545 = vld [vmem:[#allocation2 + $0x40] sm:$0xff]
        %v546 = vld [vmem:[#allocation2 + $0x48] sm:$0xff]
        %v547 = vld [vmem:[#allocation2 + $0x50] sm:$0xff]
        %v548 = vld [vmem:[#allocation2 + $0x58] sm:$0xff]
        %v549 = vld [vmem:[#allocation2 + $0x60] sm:$0xff]
        %v550 = vld [vmem:[#allocation2 + $0x68] sm:$0xff]
        %v551 = vld [vmem:[#allocation2 + $0x70] sm:$0xff]
        %v552 = vld [vmem:[#allocation2 + $0x78] sm:$0xff]
        %vm553 = vcmp.gt.f32.partialorder %v335, 0.0
        %vm554 = vcmp.gt.f32.partialorder %v336, 0.0
        %v555 = vsel %vm553, 1, 0
        %v556 = vsel %vm554, 1, 0
        %vm557 = vcmp.eq.s32.totalorder %v555, 1
        %vm558 = vcmp.eq.s32.totalorder %v556, 1
        %v559 = vsel %vm557, %v537, -1e+10
        %v560 = vsel %vm558, %v538, -1e+10
        %v561 = vsel %vm557, %v539, -1e+10
        %v562 = vsel %vm558, %v540, -1e+10
        %v563 = vsel %vm557, %v541, -1e+10
        %v564 = vsel %vm558, %v542, -1e+10
        %v565 = vsel %vm557, %v543, -1e+10
        %v566 = vsel %vm558, %v544, -1e+10
        %v567 = vsel %vm557, %v545, -1e+10
        %v568 = vsel %vm558, %v546, -1e+10
        %v569 = vsel %vm557, %v547, -1e+10
        %v570 = vsel %vm558, %v548, -1e+10
        %v571 = vsel %vm557, %v549, -1e+10
        %v572 = vsel %vm558, %v550, -1e+10
        %v573 = vsel %vm557, %v551, -1e+10
        %v574 = vsel %vm558, %v552, -1e+10
        %v575 = vsel %vm359, %v559, -inf
        %576 = vmax.xlane.f32.xlu0 %v575
        %v577 = vpop.xlane.xlu0 %576
        %v578 = vsel %vm359, %v560, -inf
        %579 = vmax.xlane.f32.xlu0 %v578
        %v580 = vpop.xlane.xlu0 %579
        %v581 = vsel %vm359, %v561, -inf
        %582 = vmax.xlane.f32.xlu0 %v581
        %v583 = vpop.xlane.xlu0 %582
        %v584 = vsel %vm359, %v562, -inf
        %585 = vmax.xlane.f32.xlu0 %v584
        %v586 = vpop.xlane.xlu0 %585
        %v587 = vsel %vm359, %v563, -inf
        %588 = vmax.xlane.f32.xlu0 %v587
        %v589 = vpop.xlane.xlu0 %588
        %v590 = vsel %vm359, %v564, -inf
        %591 = vmax.xlane.f32.xlu0 %v590
        %v592 = vpop.xlane.xlu0 %591
        %v593 = vsel %vm359, %v565, -inf
        %594 = vmax.xlane.f32.xlu0 %v593
        %v595 = vpop.xlane.xlu0 %594
        %v596 = vsel %vm359, %v566, -inf
        %597 = vmax.xlane.f32.xlu0 %v596
        %v598 = vpop.xlane.xlu0 %597
        %v599 = vsel %vm359, %v567, -inf
        %600 = vmax.xlane.f32.xlu0 %v599
        %v601 = vpop.xlane.xlu0 %600
        %v602 = vsel %vm359, %v568, -inf
        %603 = vmax.xlane.f32.xlu0 %v602
        %v604 = vpop.xlane.xlu0 %603
        %v605 = vsel %vm359, %v569, -inf
        %606 = vmax.xlane.f32.xlu0 %v605
        %v607 = vpop.xlane.xlu0 %606
        %v608 = vsel %vm359, %v570, -inf
        %609 = vmax.xlane.f32.xlu0 %v608
        %v610 = vpop.xlane.xlu0 %609
        %v611 = vsel %vm359, %v571, -inf
        %612 = vmax.xlane.f32.xlu0 %v611
        %v613 = vpop.xlane.xlu0 %612
        %v614 = vsel %vm359, %v572, -inf
        %615 = vmax.xlane.f32.xlu0 %v614
        %v616 = vpop.xlane.xlu0 %615
        %v617 = vsel %vm359, %v573, -inf
        %618 = vmax.xlane.f32.xlu0 %v617
        %v619 = vpop.xlane.xlu0 %618
        %v620 = vsel %vm359, %v574, -inf
        %621 = vmax.xlane.f32.xlu0 %v620
        %v622 = vpop.xlane.xlu0 %621
        %v623 = vsub.f32 %v559, %v577
        %v624 = vsub.f32 %v560, %v580
        %v625 = vsub.f32 %v561, %v583
        %v626 = vsub.f32 %v562, %v586
        %v627 = vsub.f32 %v563, %v589
        %v628 = vsub.f32 %v564, %v592
        %v629 = vsub.f32 %v565, %v595
        %v630 = vsub.f32 %v566, %v598
        %v631 = vsub.f32 %v567, %v601
        %v632 = vsub.f32 %v568, %v604
        %v633 = vsub.f32 %v569, %v607
        %v634 = vsub.f32 %v570, %v610
        %v635 = vsub.f32 %v571, %v613
        %v636 = vsub.f32 %v572, %v616
        %v637 = vsub.f32 %v573, %v619
        %v638 = vsub.f32 %v574, %v622
        %v639 = vmul.f32 %v623, 1.442695
        %v640 = vpow.pop %v639
        %v641 = vmul.f32 %v624, 1.442695
        %v642 = vpow.pop %v641
        %v643 = vmul.f32 %v625, 1.442695
        %v644 = vpow.pop %v643
        %v645 = vmul.f32 %v626, 1.442695
        %v646 = vpow.pop %v645
        %v647 = vmul.f32 %v627, 1.442695
        %v648 = vpow.pop %v647
        %v649 = vmul.f32 %v628, 1.442695
        %v650 = vpow.pop %v649
        %v651 = vmul.f32 %v629, 1.442695
        %v652 = vpow.pop %v651
        %v653 = vmul.f32 %v630, 1.442695
        %v654 = vpow.pop %v653
        %v655 = vmul.f32 %v631, 1.442695
        %v656 = vpow.pop %v655
        %v657 = vmul.f32 %v632, 1.442695
        %v658 = vpow.pop %v657
        %v659 = vmul.f32 %v633, 1.442695
        %v660 = vpow.pop %v659
        %v661 = vmul.f32 %v634, 1.442695
        %v662 = vpow.pop %v661
        %v663 = vmul.f32 %v635, 1.442695
        %v664 = vpow.pop %v663
        %v665 = vmul.f32 %v636, 1.442695
        %v666 = vpow.pop %v665
        %v667 = vmul.f32 %v637, 1.442695
        %v668 = vpow.pop %v667
        %v669 = vmul.f32 %v638, 1.442695
        %v670 = vpow.pop %v669
        %v671 = vsel %vm359, %v640, 0.0
        %672 = vadd.xlane.f32.xlu0 %v671
        %v673 = vpop.xlane.xlu0 %672
        %v674 = vsel %vm359, %v642, 0.0
        %675 = vadd.xlane.f32.xlu0 %v674
        %v676 = vpop.xlane.xlu0 %675
        %v677 = vsel %vm359, %v644, 0.0
        %678 = vadd.xlane.f32.xlu0 %v677
        %v679 = vpop.xlane.xlu0 %678
        %v680 = vsel %vm359, %v646, 0.0
        %681 = vadd.xlane.f32.xlu0 %v680
        %v682 = vpop.xlane.xlu0 %681
        %v683 = vsel %vm359, %v648, 0.0
        %684 = vadd.xlane.f32.xlu0 %v683
        %v685 = vpop.xlane.xlu0 %684
        %v686 = vsel %vm359, %v650, 0.0
        %687 = vadd.xlane.f32.xlu0 %v686
        %v688 = vpop.xlane.xlu0 %687
        %v689 = vsel %vm359, %v652, 0.0
        %690 = vadd.xlane.f32.xlu0 %v689
        %v691 = vpop.xlane.xlu0 %690
        %v692 = vsel %vm359, %v654, 0.0
        %693 = vadd.xlane.f32.xlu0 %v692
        %v694 = vpop.xlane.xlu0 %693
        %v695 = vsel %vm359, %v656, 0.0
        %696 = vadd.xlane.f32.xlu0 %v695
        %v697 = vpop.xlane.xlu0 %696
        %v698 = vsel %vm359, %v658, 0.0
        %699 = vadd.xlane.f32.xlu0 %v698
        %v700 = vpop.xlane.xlu0 %699
        %v701 = vsel %vm359, %v660, 0.0
        %702 = vadd.xlane.f32.xlu0 %v701
        %v703 = vpop.xlane.xlu0 %702
        %v704 = vsel %vm359, %v662, 0.0
        %705 = vadd.xlane.f32.xlu0 %v704
        %v706 = vpop.xlane.xlu0 %705
        %v707 = vsel %vm359, %v664, 0.0
        %708 = vadd.xlane.f32.xlu0 %v707
        %v709 = vpop.xlane.xlu0 %708
        %v710 = vsel %vm359, %v666, 0.0
        %711 = vadd.xlane.f32.xlu0 %v710
        %v712 = vpop.xlane.xlu0 %711
        %v713 = vsel %vm359, %v668, 0.0
        %714 = vadd.xlane.f32.xlu0 %v713
        %v715 = vpop.xlane.xlu0 %714
        %v716 = vsel %vm359, %v670, 0.0
        %717 = vadd.xlane.f32.xlu0 %v716
        %v718 = vpop.xlane.xlu0 %717
        %v719 = vrcp.pop %v673
        %v720 = vrcp.pop %v676
        %v721 = vrcp.pop %v679
        %v722 = vrcp.pop %v682
        %v723 = vrcp.pop %v685
        %v724 = vrcp.pop %v688
        %v725 = vrcp.pop %v691
        %v726 = vrcp.pop %v694
        %v727 = vrcp.pop %v697
        %v728 = vrcp.pop %v700
        %v729 = vrcp.pop %v703
        %v730 = vrcp.pop %v706
        %v731 = vrcp.pop %v709
        %v732 = vrcp.pop %v712
        %v733 = vrcp.pop %v715
        %v734 = vrcp.pop %v718
        %v735 = vmul.f32 %v640, %v719
        %v736 = vmul.f32 %v642, %v720
        %v737 = vmul.f32 %v644, %v721
        %v738 = vmul.f32 %v646, %v722
        %v739 = vmul.f32 %v648, %v723
        %v740 = vmul.f32 %v650, %v724
        %v741 = vmul.f32 %v652, %v725
        %v742 = vmul.f32 %v654, %v726
        %v743 = vmul.f32 %v656, %v727
        %v744 = vmul.f32 %v658, %v728
        %v745 = vmul.f32 %v660, %v729
        %v746 = vmul.f32 %v662, %v730
        %v747 = vmul.f32 %v664, %v731
        %v748 = vmul.f32 %v666, %v732
        %v749 = vmul.f32 %v668, %v733
        %v750 = vmul.f32 %v670, %v734
        %v751 = vmul.f32 %v735, %v335
        %v752 = vmul.f32 %v736, %v336
        %v753 = vmul.f32 %v737, %v335
        %v754 = vmul.f32 %v738, %v336
        %v755 = vmul.f32 %v739, %v335
        %v756 = vmul.f32 %v740, %v336
        %v757 = vmul.f32 %v741, %v335
        %v758 = vmul.f32 %v742, %v336
        %v759 = vmul.f32 %v743, %v335
        %v760 = vmul.f32 %v744, %v336
        %v761 = vmul.f32 %v745, %v335
        %v762 = vmul.f32 %v746, %v336
        %v763 = vmul.f32 %v747, %v335
        %v764 = vmul.f32 %v748, %v336
        %v765 = vmul.f32 %v749, %v335
        %v766 = vmul.f32 %v750, %v336
        %v768 = vsel %vm359, %v329, 0
        %v771 = vsel %vm359, %v330, 0
        %773 = vmatprep.subr.mxu0 0.0
        %774 = vmatpush1.msra.mxu0 %v327
        %775 = vmatprep.subr.mxu0 0.0
        %776 = vmatpush1.msra.mxu0 %v328
        %777 = vmatprep.subr.mxu0 0.0
        %778 = vmatpush1.msra.mxu0 0.0
        %779 = vmatprep.subr.mxu0 0.0
        %780 = vmatpush1.msra.mxu0 0.0
        %781 = vmatprep.subr.mxu0 0.0
        %782 = vmatpush1.msra.mxu0 0.0
        %783 = vmatprep.subr.mxu0 0.0
        %784 = vmatpush1.msra.mxu0 0.0
        %785 = vmatprep.subr.mxu0 0.0
        %786 = vmatpush1.msra.mxu0 0.0
        %787 = vmatprep.subr.mxu0 0.0
        %788 = vmatpush1.msra.mxu0 0.0
        %789 = vmatprep.subr.mxu0 0.0
        %790 = vmatpush1.msra.mxu0 0.0
        %791 = vmatprep.subr.mxu0 0.0
        %792 = vmatpush1.msra.mxu0 0.0
        %793 = vmatprep.subr.mxu0 0.0
        %794 = vmatpush1.msra.mxu0 0.0
        %795 = vmatprep.subr.mxu0 0.0
        %796 = vmatpush1.msra.mxu0 0.0
        %797 = vmatprep.subr.mxu0 0.0
        %798 = vmatpush1.msra.mxu0 0.0
        %799 = vmatprep.subr.mxu0 0.0
        %800 = vmatpush1.msra.mxu0 0.0
        %801 = vmatprep.subr.mxu0 0.0
        %802 = vmatpush1.msra.mxu0 0.0
        %803 = vmatprep.subr.mxu0 0.0
        %804 = vmatpush1.msra.mxu0 0.0
        %805 = vmatprep.subr.mxu0 0.0
        %806 = vmatpush1.msra.mxu0 0.0
        %807 = vmatprep.subr.mxu0 0.0
        %808 = vmatpush1.msra.mxu0 0.0
        %809 = vmatprep.subr.mxu0 0.0
        %810 = vmatpush1.msra.mxu0 0.0
        %811 = vmatprep.subr.mxu0 0.0
        %812 = vmatpush1.msra.mxu0 0.0
        %813 = vmatprep.subr.mxu0 0.0
        %814 = vmatpush1.msra.mxu0 0.0
        %815 = vmatprep.subr.mxu0 0.0
        %816 = vmatpush1.msra.mxu0 0.0
        %817 = vmatprep.subr.mxu0 0.0
        %818 = vmatpush1.msra.mxu0 0.0
        %819 = vmatprep.subr.mxu0 0.0
        %820 = vmatpush1.msra.mxu0 0.0
        %821 = vmatprep.subr.mxu0 0.0
        %822 = vmatpush1.msra.mxu0 0.0
        %823 = vmatprep.subr.mxu0 0.0
        %824 = vmatpush1.msra.mxu0 0.0
        %825 = vmatprep.subr.mxu0 0.0
        %826 = vmatpush1.msra.mxu0 0.0
        %827 = vmatprep.subr.mxu0 0.0
        %828 = vmatpush1.msra.mxu0 0.0
        %829 = vmatprep.subr.mxu0 0.0
        %830 = vmatpush1.msra.mxu0 0.0
        %831 = vmatprep.subr.mxu0 0.0
        %832 = vmatpush1.msra.mxu0 0.0
        %833 = vmatprep.subr.mxu0 0.0
        %834 = vmatpush1.msra.mxu0 0.0
        %835 = vmatprep.subr.mxu0 0.0
        %836 = vmatpush1.msra.mxu0 0.0
        %837 = vmatprep.mubr.f32.mxu0 0.0
        %838 = vmatmul.mubr.f32.gmra.mrb[0].mxu0 %v768
        %v839 = vpop.f32.mrb[0].mxu0
        %v840 = vadd.f32 0.0, %v839
        %v841 = vpop.f32.mrb[0].mxu0
        %842 = vmatprep.mubr.f32.mxu0 0.0
        %843 = vmatmul.mubr.f32.gmra.mrb[0].mxu0 %v771
        %v844 = vpop.f32.mrb[0].mxu0
        %v845 = vadd.f32 0.0, %v844
        %v846 = vpop.f32.mrb[0].mxu0
        %847 = vdwg.mxu0
        %v848 = vlaneseq
        %v849 = vshrl.u32 %v848, 7
        %v850 = vadd.s32 %v849, 8
        %v851 = vlaneseq
        %v852 = vand.u32 %v851, 127
        %vm853 = vcmp.eq.s32.totalorder %v849, %v852
        %vm854 = vcmp.eq.s32.totalorder %v850, %v852
        %v856 = vcombine.high %v840, %v840
        %v858 = vunpack.c.l.s4 1966171168
        %v859 = vunpack.c.0.s8 %v858
        %v860 = vlaneseq
        %v861 = vshrl.u32 %v860, 7
        %v862 = vsub.s32 %v859, %v861
        %v863 = vrot.slane %v840, %v862
        %v865 = vunpack.c.l.s4 1966171168
        %v866 = vunpack.c.0.s8 %v865
        %v867 = vlaneseq
        %v868 = vshrl.u32 %v867, 7
        %v869 = vsub.s32 %v866, %v868
        %v870 = vrot.slane %v856, %v869
        %v871 = vcombine.high %v863, %v863
        %v872 = vcombine.high %v870, %v870
        %v874 = vunpack.c.l.s4 1966171168
        %v875 = vunpack.c.0.s8 %v874
        %v876 = vlaneseq
        %v877 = vshrl.u32 %v876, 7
        %v878 = vsub.s32 %v875, %v877
        %v879 = vrot.slane %v863, %v878
        %v881 = vunpack.c.l.s4 1966171168
        %v882 = vunpack.c.0.s8 %v881
        %v883 = vlaneseq
        %v884 = vshrl.u32 %v883, 7
        %v885 = vsub.s32 %v882, %v884
        %v886 = vrot.slane %v870, %v885
        %v888 = vunpack.c.l.s4 1966171168
        %v889 = vunpack.c.0.s8 %v888
        %v890 = vlaneseq
        %v891 = vshrl.u32 %v890, 7
        %v892 = vsub.s32 %v889, %v891
        %v893 = vrot.slane %v871, %v892
        %v895 = vunpack.c.l.s4 1966171168
        %v896 = vunpack.c.0.s8 %v895
        %v897 = vlaneseq
        %v898 = vshrl.u32 %v897, 7
        %v899 = vsub.s32 %v896, %v898
        %v900 = vrot.slane %v872, %v899
        %v901 = vcombine.high %v879, %v879
        %v902 = vcombine.high %v886, %v886
        %v903 = vcombine.high %v893, %v893
        %v904 = vcombine.high %v900, %v900
        %v906 = vcombine.high %v845, %v845
        %v908 = vunpack.c.l.s4 1966171168
        %v909 = vunpack.c.0.s8 %v908
        %v910 = vlaneseq
        %v911 = vshrl.u32 %v910, 7
        %v912 = vsub.s32 %v909, %v911
        %v913 = vrot.slane %v845, %v912
        %v915 = vunpack.c.l.s4 1966171168
        %v916 = vunpack.c.0.s8 %v915
        %v917 = vlaneseq
        %v918 = vshrl.u32 %v917, 7
        %v919 = vsub.s32 %v916, %v918
        %v920 = vrot.slane %v906, %v919
        %v921 = vcombine.high %v913, %v913
        %v922 = vcombine.high %v920, %v920
        %v924 = vunpack.c.l.s4 1966171168
        %v925 = vunpack.c.0.s8 %v924
        %v926 = vlaneseq
        %v927 = vshrl.u32 %v926, 7
        %v928 = vsub.s32 %v925, %v927
        %v929 = vrot.slane %v913, %v928
        %v931 = vunpack.c.l.s4 1966171168
        %v932 = vunpack.c.0.s8 %v931
        %v933 = vlaneseq
        %v934 = vshrl.u32 %v933, 7
        %v935 = vsub.s32 %v932, %v934
        %v936 = vrot.slane %v920, %v935
        %v938 = vunpack.c.l.s4 1966171168
        %v939 = vunpack.c.0.s8 %v938
        %v940 = vlaneseq
        %v941 = vshrl.u32 %v940, 7
        %v942 = vsub.s32 %v939, %v941
        %v943 = vrot.slane %v921, %v942
        %v945 = vunpack.c.l.s4 1966171168
        %v946 = vunpack.c.0.s8 %v945
        %v947 = vlaneseq
        %v948 = vshrl.u32 %v947, 7
        %v949 = vsub.s32 %v946, %v948
        %v950 = vrot.slane %v922, %v949
        %v951 = vcombine.high %v929, %v929
        %v952 = vcombine.high %v936, %v936
        %v953 = vcombine.high %v943, %v943
        %v954 = vcombine.high %v950, %v950
        %v955 = vsel %vm853, 1, 0
        %v956 = vsel %vm854, 1, 0
        %vm957 = vcmp.eq.s32.totalorder %v955, 1
        %vm958 = vcmp.eq.s32.totalorder %v956, 1
        %v959 = vlaneseq
        %v960 = vshrl.u32 %v959, 7
        %v961 = vsub.s32 0, %v960
        %v962 = vrot.slane %v879, %v961
        %v963 = vlaneseq
        %v964 = vshrl.u32 %v963, 7
        %v965 = vsub.s32 0, %v964
        %v966 = vrot.slane %v893, %v965
        %v967 = vlaneseq
        %v968 = vshrl.u32 %v967, 7
        %v969 = vsub.s32 0, %v968
        %v970 = vrot.slane %v901, %v969
        %v971 = vlaneseq
        %v972 = vshrl.u32 %v971, 7
        %v973 = vsub.s32 0, %v972
        %v974 = vrot.slane %v903, %v973
        %v975 = vlaneseq
        %v976 = vshrl.u32 %v975, 7
        %v977 = vsub.s32 0, %v976
        %v978 = vrot.slane %v886, %v977
        %v979 = vlaneseq
        %v980 = vshrl.u32 %v979, 7
        %v981 = vsub.s32 0, %v980
        %v982 = vrot.slane %v900, %v981
        %v983 = vlaneseq
        %v984 = vshrl.u32 %v983, 7
        %v985 = vsub.s32 0, %v984
        %v986 = vrot.slane %v902, %v985
        %v987 = vlaneseq
        %v988 = vshrl.u32 %v987, 7
        %v989 = vsub.s32 0, %v988
        %v990 = vrot.slane %v904, %v989
        %v999 = vlaneseq
        %v1000 = vshrl.u32 %v999, 7
        %v1001 = vsub.s32 0, %v1000
        %v1002 = vrot.slane %v929, %v1001
        %v1003 = vlaneseq
        %v1004 = vshrl.u32 %v1003, 7
        %v1005 = vsub.s32 0, %v1004
        %v1006 = vrot.slane %v943, %v1005
        %v1007 = vlaneseq
        %v1008 = vshrl.u32 %v1007, 7
        %v1009 = vsub.s32 0, %v1008
        %v1010 = vrot.slane %v951, %v1009
        %v1011 = vlaneseq
        %v1012 = vshrl.u32 %v1011, 7
        %v1013 = vsub.s32 0, %v1012
        %v1014 = vrot.slane %v953, %v1013
        %v1015 = vlaneseq
        %v1016 = vshrl.u32 %v1015, 7
        %v1017 = vsub.s32 0, %v1016
        %v1018 = vrot.slane %v936, %v1017
        %v1019 = vlaneseq
        %v1020 = vshrl.u32 %v1019, 7
        %v1021 = vsub.s32 0, %v1020
        %v1022 = vrot.slane %v950, %v1021
        %v1023 = vlaneseq
        %v1024 = vshrl.u32 %v1023, 7
        %v1025 = vsub.s32 0, %v1024
        %v1026 = vrot.slane %v952, %v1025
        %v1027 = vlaneseq
        %v1028 = vshrl.u32 %v1027, 7
        %v1029 = vsub.s32 0, %v1028
        %v1030 = vrot.slane %v954, %v1029
        %v1039 = vsel %vm957, %v962, %v1002
        %v1040 = vsel %vm958, %v962, %v1002
        %v1041 = vsel %vm957, %v966, %v1006
        %v1042 = vsel %vm958, %v966, %v1006
        %v1043 = vsel %vm957, %v970, %v1010
        %v1044 = vsel %vm958, %v970, %v1010
        %v1045 = vsel %vm957, %v974, %v1014
        %v1046 = vsel %vm958, %v974, %v1014
        %v1047 = vsel %vm957, %v978, %v1018
        %v1048 = vsel %vm958, %v978, %v1018
        %v1049 = vsel %vm957, %v982, %v1022
        %v1050 = vsel %vm958, %v982, %v1022
        %v1051 = vsel %vm957, %v986, %v1026
        %v1052 = vsel %vm958, %v986, %v1026
        %v1053 = vsel %vm957, %v990, %v1030
        %v1054 = vsel %vm958, %v990, %v1030
        %v1055 = vmul.f32 %v751, %v1039
        %v1056 = vmul.f32 %v752, %v1040
        %v1057 = vmul.f32 %v753, %v1041
        %v1058 = vmul.f32 %v754, %v1042
        %v1059 = vmul.f32 %v755, %v1043
        %v1060 = vmul.f32 %v756, %v1044
        %v1061 = vmul.f32 %v757, %v1045
        %v1062 = vmul.f32 %v758, %v1046
        %v1063 = vmul.f32 %v759, %v1047
        %v1064 = vmul.f32 %v760, %v1048
        %v1065 = vmul.f32 %v761, %v1049
        %v1066 = vmul.f32 %v762, %v1050
        %v1067 = vmul.f32 %v763, %v1051
        %v1068 = vmul.f32 %v764, %v1052
        %v1069 = vmul.f32 %v765, %v1053
        %v1070 = vmul.f32 %v766, %v1054
        %v1071 = vsel %vm359, %v1055, 0.0
        %1072 = vadd.xlane.f32.xlu0 %v1071
        %v1073 = vpop.xlane.xlu0 %1072
        %v1074 = vsel %vm359, %v1056, 0.0
        %1075 = vadd.xlane.f32.xlu0 %v1074
        %v1076 = vpop.xlane.xlu0 %1075
        %v1077 = vsel %vm359, %v1057, 0.0
        %1078 = vadd.xlane.f32.xlu0 %v1077
        %v1079 = vpop.xlane.xlu0 %1078
        %v1080 = vsel %vm359, %v1058, 0.0
        %1081 = vadd.xlane.f32.xlu0 %v1080
        %v1082 = vpop.xlane.xlu0 %1081
        %v1083 = vsel %vm359, %v1059, 0.0
        %1084 = vadd.xlane.f32.xlu0 %v1083
        %v1085 = vpop.xlane.xlu0 %1084
        %v1086 = vsel %vm359, %v1060, 0.0
        %1087 = vadd.xlane.f32.xlu0 %v1086
        %v1088 = vpop.xlane.xlu0 %1087
        %v1089 = vsel %vm359, %v1061, 0.0
        %1090 = vadd.xlane.f32.xlu0 %v1089
        %v1091 = vpop.xlane.xlu0 %1090
        %v1092 = vsel %vm359, %v1062, 0.0
        %1093 = vadd.xlane.f32.xlu0 %v1092
        %v1094 = vpop.xlane.xlu0 %1093
        %v1095 = vsel %vm359, %v1063, 0.0
        %1096 = vadd.xlane.f32.xlu0 %v1095
        %v1097 = vpop.xlane.xlu0 %1096
        %v1098 = vsel %vm359, %v1064, 0.0
        %1099 = vadd.xlane.f32.xlu0 %v1098
        %v1100 = vpop.xlane.xlu0 %1099
        %v1101 = vsel %vm359, %v1065, 0.0
        %1102 = vadd.xlane.f32.xlu0 %v1101
        %v1103 = vpop.xlane.xlu0 %1102
        %v1104 = vsel %vm359, %v1066, 0.0
        %1105 = vadd.xlane.f32.xlu0 %v1104
        %v1106 = vpop.xlane.xlu0 %1105
        %v1107 = vsel %vm359, %v1067, 0.0
        %1108 = vadd.xlane.f32.xlu0 %v1107
        %v1109 = vpop.xlane.xlu0 %1108
        %v1110 = vsel %vm359, %v1068, 0.0
        %1111 = vadd.xlane.f32.xlu0 %v1110
        %v1112 = vpop.xlane.xlu0 %1111
        %v1113 = vsel %vm359, %v1069, 0.0
        %1114 = vadd.xlane.f32.xlu0 %v1113
        %v1115 = vpop.xlane.xlu0 %1114
        %v1116 = vsel %vm359, %v1070, 0.0
        %1117 = vadd.xlane.f32.xlu0 %v1116
        %v1118 = vpop.xlane.xlu0 %1117
        %v1135 = vlaneseq
        %v1136 = vshrl.u32 %v1135, 7
        %v1137 = vsub.s32 %v852, %v1136
        %v1138 = vrot.slane %v1073, %v1137
        %v1139 = vadd.s32 %v852, 4294967288
        %v1140 = vlaneseq
        %v1141 = vshrl.u32 %v1140, 7
        %v1142 = vsub.s32 %v1139, %v1141
        %v1143 = vrot.slane %v1076, %v1142
        %vm1144 = vcmask 130112
        %v1145 = vsel %vm1144, %v1143, %v1138
        %v1146 = vlaneseq
        %v1147 = vshrl.u32 %v1146, 7
        %v1148 = vsub.s32 %v852, %v1147
        %v1149 = vrot.slane %v1079, %v1148
        %v1150 = vlaneseq
        %v1151 = vshrl.u32 %v1150, 7
        %v1152 = vsub.s32 %v1139, %v1151
        %v1153 = vrot.slane %v1082, %v1152
        %v1154 = vsel %vm1144, %v1153, %v1149
        %v1155 = vlaneseq
        %v1156 = vshrl.u32 %v1155, 7
        %v1157 = vsub.s32 %v852, %v1156
        %v1158 = vrot.slane %v1085, %v1157
        %v1159 = vlaneseq
        %v1160 = vshrl.u32 %v1159, 7
        %v1161 = vsub.s32 %v1139, %v1160
        %v1162 = vrot.slane %v1088, %v1161
        %v1163 = vsel %vm1144, %v1162, %v1158
        %v1164 = vlaneseq
        %v1165 = vshrl.u32 %v1164, 7
        %v1166 = vsub.s32 %v852, %v1165
        %v1167 = vrot.slane %v1091, %v1166
        %v1168 = vlaneseq
        %v1169 = vshrl.u32 %v1168, 7
        %v1170 = vsub.s32 %v1139, %v1169
        %v1171 = vrot.slane %v1094, %v1170
        %v1172 = vsel %vm1144, %v1171, %v1167
        %v1173 = vlaneseq
        %v1174 = vshrl.u32 %v1173, 7
        %v1175 = vsub.s32 %v852, %v1174
        %v1176 = vrot.slane %v1097, %v1175
        %v1177 = vlaneseq
        %v1178 = vshrl.u32 %v1177, 7
        %v1179 = vsub.s32 %v1139, %v1178
        %v1180 = vrot.slane %v1100, %v1179
        %v1181 = vsel %vm1144, %v1180, %v1176
        %v1182 = vlaneseq
        %v1183 = vshrl.u32 %v1182, 7
        %v1184 = vsub.s32 %v852, %v1183
        %v1185 = vrot.slane %v1103, %v1184
        %v1186 = vlaneseq
        %v1187 = vshrl.u32 %v1186, 7
        %v1188 = vsub.s32 %v1139, %v1187
        %v1189 = vrot.slane %v1106, %v1188
        %v1190 = vsel %vm1144, %v1189, %v1185
        %v1191 = vlaneseq
        %v1192 = vshrl.u32 %v1191, 7
        %v1193 = vsub.s32 %v852, %v1192
        %v1194 = vrot.slane %v1109, %v1193
        %v1195 = vlaneseq
        %v1196 = vshrl.u32 %v1195, 7
        %v1197 = vsub.s32 %v1139, %v1196
        %v1198 = vrot.slane %v1112, %v1197
        %v1199 = vsel %vm1144, %v1198, %v1194
        %v1200 = vlaneseq
        %v1201 = vshrl.u32 %v1200, 7
        %v1202 = vsub.s32 %v852, %v1201
        %v1203 = vrot.slane %v1115, %v1202
        %v1204 = vlaneseq
        %v1205 = vshrl.u32 %v1204, 7
        %v1206 = vsub.s32 %v1139, %v1205
        %v1207 = vrot.slane %v1118, %v1206
        %v1208 = vsel %vm1144, %v1207, %v1203
        %vm1209 = vcmask 1041409
        %v1210 = vsel %vm1209, %v1154, %v1145
        %vm1211 = vcmask 1042434
        %v1212 = vsel %vm1211, %v1163, %v1210
        %vm1213 = vcmask 1043459
        %v1214 = vsel %vm1213, %v1172, %v1212
        %vm1215 = vcmask 1044484
        %v1216 = vsel %vm1215, %v1181, %v1214
        %vm1217 = vcmask 1045509
        %v1218 = vsel %vm1217, %v1190, %v1216
        %vm1219 = vcmask 1046534
        %v1220 = vsel %vm1219, %v1199, %v1218
        %vm1221 = vcmask 1047559
        %v1222 = vsel %vm1221, %v1208, %v1220
        %1224 = vst.msk [vmem:[%s311] sm:$0xff] %vm359, %v1222
        %s1225 = sand.u32 %s154, 1
        %s1226 = scalar_lea.sflag [#allocation5], %s1225
        %s1227 = sand.u32 %s154, 1
        %s1228 = smul.addr %s1227, 8
        %s1229 = scalar_lea.vmem [#allocation10], %s1228
        // Predicated region
        $region53: #{graph_conv.1} parent=39 // pred_check
          %p1230 = pneg %p164
        $region54: #{graph_conv.1} parent=39 // pred_check_branch
          %1232 = sbr.rel (%p1230) target = $region56
        $region55: #{graph_conv.1} parent=39 // pred_region
          %s1234 = ssub.s32 128, 128
          %1235 = vsyncadd %s1226, %s1234
          %s1236 = smul.addr %s26, 128
          %s1237 = scalar_lea.hbm %s5, %s1236
          %s1239 = sshll.u32 %s1229, 4
          %s1240 = int_to_ptr.vmem [resolvable:$true] %s1239
          %1242 = dma.vmem_to_hbm [thread:$0]  %s1240, 128, %s1237, %s1226
        $region56: #{graph_conv.1} parent=39 // pred_fallthru
          _
      $region40: #{graph_conv.1} parent=5 // pred_fallthru
        _
      %p1243 = scmp.le.s32.totalorder 2, %s21
      // Predicated region
      $region57: #{graph_conv.1} parent=5 // pred_check
        %p1244 = pneg %p1243
      $region58: #{graph_conv.1} parent=5 // pred_check_branch
        %1246 = sbr.rel (%p1244) target = $region60
      $region59: #{graph_conv.1} parent=5 // pred_region
        %s1247 = ssub.s32 %s21, 2
        // Predicated region
        $region61: #{graph_conv.1} parent=59 // pred_check
          %p1248 = pneg %p170
        $region62: #{graph_conv.1} parent=59 // pred_check_branch
          %1250 = sbr.rel (%p1248) target = $region64
        $region63: #{graph_conv.1} parent=59 // pred_region
          %s1251 = sand.u32 %s155, 1
          %s1252 = scalar_lea.sflag [#allocation5], %s1251
          %s1253 = sand.u32 %s155, 1
          %s1254 = smul.addr %s1253, 8
          %s1255 = scalar_lea.vmem [#allocation10], %s1254
          %1256 = dma.done %s1252, 128
        $region64: #{graph_conv.1} parent=59 // pred_fallthru
          _
      $region60: #{graph_conv.1} parent=5 // pred_fallthru
        _
    $region6: #{graph_conv.1} parent=1 // loop_footer
      %s25 = sadd.s32 1, %s21
    $region7: #{graph_conv.1} parent=1 // loop_footer_branch
      %20 = sbr.rel target = $region3
    $region8: #{graph_conv.1} parent=1 // loop_exit
      _
    %1257 = vsyncpa [#allocation4], 1
    %s1258 = scalar_lea.sflag [#allocation4], 1
    %1259 = vsyncpa %s1258, 1
    %1260 = vsyncpa [#allocation8], 1
    %s1261 = scalar_lea.sflag [#allocation8], 1
    %1262 = vsyncpa %s1261, 1
    %1263 = vsyncpa [#allocation5], 1
    %s1264 = scalar_lea.sflag [#allocation5], 1
    %1265 = vsyncpa %s1264, 1
    %1266 = vsyncpa [#allocation6], 1
    %s1267 = scalar_lea.sflag [#allocation6], 1
    %1268 = vsyncpa %s1267, 1

</llo_original>
